<compile_context>
chip_gen: v5e
topology: v5e:2x2
jax: 0.10.0
libtpu: 0.0.40
codegen_flags: <defaults>
</compile_context>

<pallas_src>
from functools import partial

import jax
import jax.numpy as jnp
from jax.experimental import pallas as pl
from jax.experimental.pallas import tpu as pltpu

HIDDEN = 64       # self.obs_hidden_size
N_LAYERS = 4      # self.obs_n_layers
SLOT = 128        # lane-aligned slot width per gate / per layer-state


# ---------------------------------------------------------------------------
# Kernel: 4 stacked GRU cells (seq_len == 1) + affine head, all in VMEM.
# ---------------------------------------------------------------------------
def _gru_policy_kernel(x_ref, h_ref, w_ref, b_ref, waff_ref, baff_ref,
                       logits_ref, hout_ref):
    S = SLOT
    x = x_ref[...]                                    # (B, 128) f32, zero-padded
    h_outs = []
    for l in range(N_LAYERS):                         # static unroll (layers are sequential)
        h = h_ref[:, l * S:(l + 1) * S]               # (B, 128) f32, lanes [64:128) are 0
        cat = jnp.concatenate([x, h], axis=-1).astype(jnp.bfloat16)   # (B, 256) bf16
        # one fused MXU matmul per layer: [r | z | n_i | n_h], each in a 128-lane slot
        g = jnp.dot(cat, w_ref[l],
                    preferred_element_type=jnp.float32) + b_ref[l]    # (B, 512) f32
        r = jax.nn.sigmoid(g[:, 0 * S:1 * S])
        z = jax.nn.sigmoid(g[:, 1 * S:2 * S])
        n = jnp.tanh(g[:, 2 * S:3 * S] + r * g[:, 3 * S:4 * S])
        h_new = (1.0 - z) * n + z * h                 # padded lanes stay exactly 0
        h_outs.append(h_new)
        x = h_new
        # TODO(synk): nn.GRU(dropout=0.5) applies dropout between layers only in
        # training mode; this kernel implements the eval-mode forward (no dropout).
    hout_ref[...] = jnp.concatenate(h_outs, axis=-1)  # (B, 4*128) lane-dense store
    logits_ref[...] = jnp.dot(x.astype(jnp.bfloat16), waff_ref[...],
                              preferred_element_type=jnp.float32) + baff_ref[...]
    # TODO(synk): if this policy is rolled out over T steps, move the time loop
    # inside the kernel (grid axis) to keep weights VMEM-resident across steps.


# ---------------------------------------------------------------------------
# One-time parameter packing (hoisted out of the per-step path).
# ---------------------------------------------------------------------------
def pack_params(params):
    """Pack PyTorch-layout GRU + Linear params into MXU/lane-friendly tensors."""
    H, L, A = HIDDEN, N_LAYERS, params["affine_w"].shape[0]
    w_cat, b_cat = [], []
    for l in range(L):
        w_ih = params[f"w_ih_l{l}"]          # (3H, in_dim)  rows: [r | z | n]
        w_hh = params[f"w_hh_l{l}"]          # (3H, H)
        b_ih = params[f"b_ih_l{l}"]          # (3H,)
        b_hh = params[f"b_hh_l{l}"]          # (3H,)
        in_dim = w_ih.shape[1]
        w = jnp.zeros((2 * SLOT, 4 * SLOT), jnp.float32)
        # rows [0:128)  <- x slot contribution, rows [128:256) <- h slot contribution
        for gi in range(2):                  # r, z: both x and h parts go to same slot
            w = w.at[:in_dim, gi * SLOT:gi * SLOT + H].set(w_ih[gi * H:(gi + 1) * H, :].T)
            w = w.at[SLOT:SLOT + H, gi * SLOT:gi * SLOT + H].set(w_hh[gi * H:(gi + 1) * H, :].T)
        # n gate: input part and hidden part must stay separate (r gates only the h part)
        w = w.at[:in_dim, 2 * SLOT:2 * SLOT + H].set(w_ih[2 * H:3 * H, :].T)       # n_i
        w = w.at[SLOT:SLOT + H, 3 * SLOT:3 * SLOT + H].set(w_hh[2 * H:3 * H, :].T)  # n_h
        b = jnp.zeros((1, 4 * SLOT), jnp.float32)
        b = b.at[0, 0 * SLOT:0 * SLOT + H].set(b_ih[0:H] + b_hh[0:H])              # r (merged)
        b = b.at[0, 1 * SLOT:1 * SLOT + H].set(b_ih[H:2 * H] + b_hh[H:2 * H])      # z (merged)
        b = b.at[0, 2 * SLOT:2 * SLOT + H].set(b_ih[2 * H:3 * H])                  # n_i
        b = b.at[0, 3 * SLOT:3 * SLOT + H].set(b_hh[2 * H:3 * H])                  # n_h
        w_cat.append(w)
        b_cat.append(b)
    w_aff = jnp.zeros((SLOT, SLOT), jnp.float32).at[:H, :A].set(params["affine_w"].T)
    b_aff = jnp.zeros((1, SLOT), jnp.float32).at[0, :A].set(params["affine_b"])
    return {
        "w_cat": jnp.stack(w_cat).astype(jnp.bfloat16),   # (L, 256, 512) bf16
        "b_cat": jnp.stack(b_cat),                        # (L, 1, 512)   f32
        "w_aff": w_aff.astype(jnp.bfloat16),              # (128, 128)    bf16
        "b_aff": b_aff,                                   # (1, 128)      f32
    }


def pack_state(h):
    """(N_LAYERS, B, HIDDEN) -> lane-dense packed state (B, N_LAYERS*SLOT)."""
    L, B, H = h.shape
    out = jnp.zeros((B, L * SLOT), jnp.float32)
    for l in range(L):
        out = out.at[:, l * SLOT:l * SLOT + H].set(h[l])
    return out


def unpack_state(hp):
    """(B, N_LAYERS*SLOT) -> (N_LAYERS, B, HIDDEN)."""
    return jnp.stack([hp[:, l * SLOT:l * SLOT + HIDDEN] for l in range(N_LAYERS)])


# ---------------------------------------------------------------------------
# Per-step wrapper (everything except obs-padding / logit-slice is precomputed).
# ---------------------------------------------------------------------------
@partial(jax.jit, static_argnums=(3,), donate_argnums=(1,))
def recurrent_policy_forward(x, h_packed, packed, action_dim):
    """x: (B, obs_dim) f32; h_packed: (B, N_LAYERS*SLOT) f32 packed GRU state
    (layer l occupies lanes [l*SLOT, l*SLOT+HIDDEN), rest zero; it is donated
    and updated in place). Returns (logits (B, action_dim), new packed state)."""
    B, obs_dim = x.shape
    x_pad = jnp.zeros((B, SLOT), jnp.float32).at[:, :obs_dim].set(x)
    vmem = pl.BlockSpec(memory_space=pltpu.MemorySpace.VMEM)
    logits_pad, h_out = pl.pallas_call(
        _gru_policy_kernel,
        out_shape=(
            jax.ShapeDtypeStruct((B, SLOT), jnp.float32),
            jax.ShapeDtypeStruct((B, N_LAYERS * SLOT), jnp.float32),
        ),
        in_specs=[vmem] * 6,
        out_specs=(vmem, vmem),
        input_output_aliases={1: 1},   # recurrent state updated in place (P8)
    )(x_pad, h_packed, packed["w_cat"], packed["b_cat"],
      packed["w_aff"], packed["b_aff"])
    return logits_pad[:, :action_dim], h_out


# ---------------------------------------------------------------------------
# Deterministic parameter init (PyTorch default: U(-1/sqrt(H), 1/sqrt(H))).
# ---------------------------------------------------------------------------
def init_params(key, obs_dim, action_dim):
    H = HIDDEN
    bound = 1.0 / jnp.sqrt(jnp.float32(H))
    params = {}
    for l in range(N_LAYERS):
        in_dim = obs_dim if l == 0 else H
        key, k1, k2, k3, k4 = jax.random.split(key, 5)
        params[f"w_ih_l{l}"] = jax.random.uniform(k1, (3 * H, in_dim), jnp.float32, -bound, bound)
        params[f"w_hh_l{l}"] = jax.random.uniform(k2, (3 * H, H), jnp.float32, -bound, bound)
        params[f"b_ih_l{l}"] = jax.random.uniform(k3, (3 * H,), jnp.float32, -bound, bound)
        params[f"b_hh_l{l}"] = jax.random.uniform(k4, (3 * H,), jnp.float32, -bound, bound)
    key, k1, k2 = jax.random.split(key, 3)
    params["affine_w"] = jax.random.uniform(k1, (action_dim, H), jnp.float32, -bound, bound)
    params["affine_b"] = jax.random.uniform(k2, (action_dim,), jnp.float32, -bound, bound)
    return params


# ---------------------------------------------------------------------------
# Pure-JAX reference (mirrors torch.nn.GRU eval-mode + nn.Linear), f32.
# ---------------------------------------------------------------------------
def reference_forward(x, h_state, params):
    H = HIDDEN
    inp = x
    h_new = []
    for l in range(N_LAYERS):
        h = h_state[l]
        gi = inp @ params[f"w_ih_l{l}"].T + params[f"b_ih_l{l}"]
        gh = h @ params[f"w_hh_l{l}"].T + params[f"b_hh_l{l}"]
        r = jax.nn.sigmoid(gi[:, 0 * H:1 * H] + gh[:, 0 * H:1 * H])
        z = jax.nn.sigmoid(gi[:, 1 * H:2 * H] + gh[:, 1 * H:2 * H])
        n = jnp.tanh(gi[:, 2 * H:3 * H] + r * gh[:, 2 * H:3 * H])
        h = (1.0 - z) * n + z * h
        h_new.append(h)
        inp = h
    logits = inp @ params["affine_w"].T + params["affine_b"]
    return logits, jnp.stack(h_new)


if __name__ == "__main__":
    key = jax.random.PRNGKey(0)
    B, OBS_DIM, ACTION_DIM = 2, 4, 2          # e.g. CartPole-like classic control

    key, kp, kx, kh = jax.random.split(key, 4)
    params = init_params(kp, OBS_DIM, ACTION_DIM)
    x = jax.random.normal(kx, (B, OBS_DIM), jnp.float32)
    h0 = jax.random.normal(kh, (N_LAYERS, B, HIDDEN), jnp.float32) * 0.1

    packed = pack_params(params)              # one-time packing (hoisted off the step path)
    h_packed = pack_state(h0)                 # lane-dense persistent state (donated below)

    logits, h_packed_new = recurrent_policy_forward(x, h_packed, packed, ACTION_DIM)
    jax.block_until_ready((logits, h_packed_new))

    ref_logits, ref_h = reference_forward(x, h0, params)
    h_new = unpack_state(h_packed_new)
    assert logits.shape == (B, ACTION_DIM)
    assert h_new.shape == (N_LAYERS, B, HIDDEN)
    # bf16 matmul operands => looser tolerance than pure-f32 (per review guidance)
    assert jnp.allclose(logits, ref_logits, atol=2e-2, rtol=2e-2)
    assert jnp.allclose(h_new, ref_h, atol=2e-2, rtol=2e-2)
    print("KERNEL_OK")
</pallas_src>

<mosaic_0001>
module attributes {stable_mosaic.version = 11 : i64} {
  func.func @_gru_policy_kernel(%arg0: memref<2x128xf32, #tpu.memory_space<vmem>>, %arg1: memref<2x512xf32, #tpu.memory_space<vmem>>, %arg2: memref<4x256x512xbf16, #tpu.memory_space<vmem>>, %arg3: memref<4x1x512xf32, #tpu.memory_space<vmem>>, %arg4: memref<128x128xbf16, #tpu.memory_space<vmem>>, %arg5: memref<1x128xf32, #tpu.memory_space<vmem>>, %arg6: memref<2x128xf32, #tpu.memory_space<vmem>>, %arg7: memref<2x512xf32, #tpu.memory_space<vmem>>) attributes {dimension_semantics = [], scalar_prefetch = 0 : i64, scratch_operands = 0 : i64, tpu.core_type = #tpu.core_type<tc>} {
    %c0 = arith.constant 0 : index
    %c0_0 = arith.constant 0 : index
    %0 = vector.load %arg0[%c0, %c0_0] : memref<2x128xf32, #tpu.memory_space<vmem>>, vector<2x128xf32>
    %c0_1 = arith.constant 0 : index
    %c0_2 = arith.constant 0 : index
    %1 = vector.load %arg1[%c0_1, %c0_2] : memref<2x512xf32, #tpu.memory_space<vmem>>, vector<2x128xf32>
    %2 = tpu.concatenate %0, %1 in 1 : vector<2x128xf32>, vector<2x128xf32> -> vector<2x256xf32>
    %3 = arith.truncf %2 : vector<2x256xf32> to vector<2x256xbf16>
    %c0_3 = arith.constant 0 : index
    %c0_4 = arith.constant 0 : index
    %c0_5 = arith.constant 0 : index
    %4 = vector.load %arg2[%c0_3, %c0_4, %c0_5] : memref<4x256x512xbf16, #tpu.memory_space<vmem>>, vector<1x256x512xbf16>
    %5 = vector.shape_cast %4 : vector<1x256x512xbf16> to vector<256x512xbf16>
    %cst = arith.constant dense<0.000000e+00> : vector<2x512xf32>
    %6 = tpu.matmul %3, %5, %cst {dimension_numbers = #tpu.dot_dimension_numbers<[1], [0], [0], [1], [0, 0, 1, 1], [], []>} : vector<2x256xbf16>, vector<256x512xbf16>, vector<2x512xf32> -> vector<2x512xf32>
    %c0_6 = arith.constant 0 : index
    %c0_7 = arith.constant 0 : index
    %c0_8 = arith.constant 0 : index
    %7 = vector.load %arg3[%c0_6, %c0_7, %c0_8] : memref<4x1x512xf32, #tpu.memory_space<vmem>>, vector<1x1x512xf32>
    %8 = vector.shape_cast %7 : vector<1x1x512xf32> to vector<1x512xf32>
    %9 = vector.broadcast %8 : vector<1x512xf32> to vector<2x512xf32>
    %10 = arith.addf %6, %9 : vector<2x512xf32>
    %11 = vector.extract_strided_slice %10 {offsets = [0, 0], sizes = [2, 128], strides = [1, 1]} : vector<2x512xf32> to vector<2x128xf32>
    %12 = arith.negf %11 : vector<2x128xf32>
    %13 = math.exp %12 : vector<2x128xf32>
    %cst_9 = arith.constant 1.000000e+00 : f32
    %14 = vector.broadcast %cst_9 : f32 to vector<2x128xf32>
    %15 = arith.addf %14, %13 : vector<2x128xf32>
    %16 = arith.divf %14, %15 : vector<2x128xf32>
    %17 = vector.extract_strided_slice %10 {offsets = [0, 128], sizes = [2, 128], strides = [1, 1]} : vector<2x512xf32> to vector<2x128xf32>
    %18 = arith.negf %17 : vector<2x128xf32>
    %19 = math.exp %18 : vector<2x128xf32>
    %cst_10 = arith.constant 1.000000e+00 : f32
    %20 = vector.broadcast %cst_10 : f32 to vector<2x128xf32>
    %21 = arith.addf %20, %19 : vector<2x128xf32>
    %22 = arith.divf %20, %21 : vector<2x128xf32>
    %23 = vector.extract_strided_slice %10 {offsets = [0, 256], sizes = [2, 128], strides = [1, 1]} : vector<2x512xf32> to vector<2x128xf32>
    %24 = vector.extract_strided_slice %10 {offsets = [0, 384], sizes = [2, 128], strides = [1, 1]} : vector<2x512xf32> to vector<2x128xf32>
    %25 = arith.mulf %16, %24 : vector<2x128xf32>
    %26 = arith.addf %23, %25 : vector<2x128xf32>
    %27 = math.tanh %26 : vector<2x128xf32>
    %cst_11 = arith.constant 1.000000e+00 : f32
    %28 = vector.broadcast %cst_11 : f32 to vector<2x128xf32>
    %29 = arith.subf %28, %22 : vector<2x128xf32>
    %30 = arith.mulf %29, %27 : vector<2x128xf32>
    %31 = arith.mulf %22, %1 : vector<2x128xf32>
    %32 = arith.addf %30, %31 : vector<2x128xf32>
    %c0_12 = arith.constant 0 : index
    %c128 = arith.constant 128 : index
    %33 = vector.load %arg1[%c0_12, %c128] : memref<2x512xf32, #tpu.memory_space<vmem>>, vector<2x128xf32>
    %34 = tpu.concatenate %32, %33 in 1 : vector<2x128xf32>, vector<2x128xf32> -> vector<2x256xf32>
    %35 = arith.truncf %34 : vector<2x256xf32> to vector<2x256xbf16>
    %c1 = arith.constant 1 : index
    %c0_13 = arith.constant 0 : index
    %c0_14 = arith.constant 0 : index
    %36 = vector.load %arg2[%c1, %c0_13, %c0_14] : memref<4x256x512xbf16, #tpu.memory_space<vmem>>, vector<1x256x512xbf16>
    %37 = vector.shape_cast %36 : vector<1x256x512xbf16> to vector<256x512xbf16>
    %cst_15 = arith.constant dense<0.000000e+00> : vector<2x512xf32>
    %38 = tpu.matmul %35, %37, %cst_15 {dimension_numbers = #tpu.dot_dimension_numbers<[1], [0], [0], [1], [0, 0, 1, 1], [], []>} : vector<2x256xbf16>, vector<256x512xbf16>, vector<2x512xf32> -> vector<2x512xf32>
    %c1_16 = arith.constant 1 : index
    %c0_17 = arith.constant 0 : index
    %c0_18 = arith.constant 0 : index
    %39 = vector.load %arg3[%c1_16, %c0_17, %c0_18] : memref<4x1x512xf32, #tpu.memory_space<vmem>>, vector<1x1x512xf32>
    %40 = vector.shape_cast %39 : vector<1x1x512xf32> to vector<1x512xf32>
    %41 = vector.broadcast %40 : vector<1x512xf32> to vector<2x512xf32>
    %42 = arith.addf %38, %41 : vector<2x512xf32>
    %43 = vector.extract_strided_slice %42 {offsets = [0, 0], sizes = [2, 128], strides = [1, 1]} : vector<2x512xf32> to vector<2x128xf32>
    %44 = arith.negf %43 : vector<2x128xf32>
    %45 = math.exp %44 : vector<2x128xf32>
    %cst_19 = arith.constant 1.000000e+00 : f32
    %46 = vector.broadcast %cst_19 : f32 to vector<2x128xf32>
    %47 = arith.addf %46, %45 : vector<2x128xf32>
    %48 = arith.divf %46, %47 : vector<2x128xf32>
    %49 = vector.extract_strided_slice %42 {offsets = [0, 128], sizes = [2, 128], strides = [1, 1]} : vector<2x512xf32> to vector<2x128xf32>
    %50 = arith.negf %49 : vector<2x128xf32>
    %51 = math.exp %50 : vector<2x128xf32>
    %cst_20 = arith.constant 1.000000e+00 : f32
    %52 = vector.broadcast %cst_20 : f32 to vector<2x128xf32>
    %53 = arith.addf %52, %51 : vector<2x128xf32>
    %54 = arith.divf %52, %53 : vector<2x128xf32>
    %55 = vector.extract_strided_slice %42 {offsets = [0, 256], sizes = [2, 128], strides = [1, 1]} : vector<2x512xf32> to vector<2x128xf32>
    %56 = vector.extract_strided_slice %42 {offsets = [0, 384], sizes = [2, 128], strides = [1, 1]} : vector<2x512xf32> to vector<2x128xf32>
    %57 = arith.mulf %48, %56 : vector<2x128xf32>
    %58 = arith.addf %55, %57 : vector<2x128xf32>
    %59 = math.tanh %58 : vector<2x128xf32>
    %cst_21 = arith.constant 1.000000e+00 : f32
    %60 = vector.broadcast %cst_21 : f32 to vector<2x128xf32>
    %61 = arith.subf %60, %54 : vector<2x128xf32>
    %62 = arith.mulf %61, %59 : vector<2x128xf32>
    %63 = arith.mulf %54, %33 : vector<2x128xf32>
    %64 = arith.addf %62, %63 : vector<2x128xf32>
    %c0_22 = arith.constant 0 : index
    %c256 = arith.constant 256 : index
    %65 = vector.load %arg1[%c0_22, %c256] : memref<2x512xf32, #tpu.memory_space<vmem>>, vector<2x128xf32>
    %66 = tpu.concatenate %64, %65 in 1 : vector<2x128xf32>, vector<2x128xf32> -> vector<2x256xf32>
    %67 = arith.truncf %66 : vector<2x256xf32> to vector<2x256xbf16>
    %c2 = arith.constant 2 : index
    %c0_23 = arith.constant 0 : index
    %c0_24 = arith.constant 0 : index
    %68 = vector.load %arg2[%c2, %c0_23, %c0_24] : memref<4x256x512xbf16, #tpu.memory_space<vmem>>, vector<1x256x512xbf16>
    %69 = vector.shape_cast %68 : vector<1x256x512xbf16> to vector<256x512xbf16>
    %cst_25 = arith.constant dense<0.000000e+00> : vector<2x512xf32>
    %70 = tpu.matmul %67, %69, %cst_25 {dimension_numbers = #tpu.dot_dimension_numbers<[1], [0], [0], [1], [0, 0, 1, 1], [], []>} : vector<2x256xbf16>, vector<256x512xbf16>, vector<2x512xf32> -> vector<2x512xf32>
    %c2_26 = arith.constant 2 : index
    %c0_27 = arith.constant 0 : index
    %c0_28 = arith.constant 0 : index
    %71 = vector.load %arg3[%c2_26, %c0_27, %c0_28] : memref<4x1x512xf32, #tpu.memory_space<vmem>>, vector<1x1x512xf32>
    %72 = vector.shape_cast %71 : vector<1x1x512xf32> to vector<1x512xf32>
    %73 = vector.broadcast %72 : vector<1x512xf32> to vector<2x512xf32>
    %74 = arith.addf %70, %73 : vector<2x512xf32>
    %75 = vector.extract_strided_slice %74 {offsets = [0, 0], sizes = [2, 128], strides = [1, 1]} : vector<2x512xf32> to vector<2x128xf32>
    %76 = arith.negf %75 : vector<2x128xf32>
    %77 = math.exp %76 : vector<2x128xf32>
    %cst_29 = arith.constant 1.000000e+00 : f32
    %78 = vector.broadcast %cst_29 : f32 to vector<2x128xf32>
    %79 = arith.addf %78, %77 : vector<2x128xf32>
    %80 = arith.divf %78, %79 : vector<2x128xf32>
    %81 = vector.extract_strided_slice %74 {offsets = [0, 128], sizes = [2, 128], strides = [1, 1]} : vector<2x512xf32> to vector<2x128xf32>
    %82 = arith.negf %81 : vector<2x128xf32>
    %83 = math.exp %82 : vector<2x128xf32>
    %cst_30 = arith.constant 1.000000e+00 : f32
    %84 = vector.broadcast %cst_30 : f32 to vector<2x128xf32>
    %85 = arith.addf %84, %83 : vector<2x128xf32>
    %86 = arith.divf %84, %85 : vector<2x128xf32>
    %87 = vector.extract_strided_slice %74 {offsets = [0, 256], sizes = [2, 128], strides = [1, 1]} : vector<2x512xf32> to vector<2x128xf32>
    %88 = vector.extract_strided_slice %74 {offsets = [0, 384], sizes = [2, 128], strides = [1, 1]} : vector<2x512xf32> to vector<2x128xf32>
    %89 = arith.mulf %80, %88 : vector<2x128xf32>
    %90 = arith.addf %87, %89 : vector<2x128xf32>
    %91 = math.tanh %90 : vector<2x128xf32>
    %cst_31 = arith.constant 1.000000e+00 : f32
    %92 = vector.broadcast %cst_31 : f32 to vector<2x128xf32>
    %93 = arith.subf %92, %86 : vector<2x128xf32>
    %94 = arith.mulf %93, %91 : vector<2x128xf32>
    %95 = arith.mulf %86, %65 : vector<2x128xf32>
    %96 = arith.addf %94, %95 : vector<2x128xf32>
    %c0_32 = arith.constant 0 : index
    %c384 = arith.constant 384 : index
    %97 = vector.load %arg1[%c0_32, %c384] : memref<2x512xf32, #tpu.memory_space<vmem>>, vector<2x128xf32>
    %98 = tpu.concatenate %96, %97 in 1 : vector<2x128xf32>, vector<2x128xf32> -> vector<2x256xf32>
    %99 = arith.truncf %98 : vector<2x256xf32> to vector<2x256xbf16>
    %c3 = arith.constant 3 : index
    %c0_33 = arith.constant 0 : index
    %c0_34 = arith.constant 0 : index
    %100 = vector.load %arg2[%c3, %c0_33, %c0_34] : memref<4x256x512xbf16, #tpu.memory_space<vmem>>, vector<1x256x512xbf16>
    %101 = vector.shape_cast %100 : vector<1x256x512xbf16> to vector<256x512xbf16>
    %cst_35 = arith.constant dense<0.000000e+00> : vector<2x512xf32>
    %102 = tpu.matmul %99, %101, %cst_35 {dimension_numbers = #tpu.dot_dimension_numbers<[1], [0], [0], [1], [0, 0, 1, 1], [], []>} : vector<2x256xbf16>, vector<256x512xbf16>, vector<2x512xf32> -> vector<2x512xf32>
    %c3_36 = arith.constant 3 : index
    %c0_37 = arith.constant 0 : index
    %c0_38 = arith.constant 0 : index
    %103 = vector.load %arg3[%c3_36, %c0_37, %c0_38] : memref<4x1x512xf32, #tpu.memory_space<vmem>>, vector<1x1x512xf32>
    %104 = vector.shape_cast %103 : vector<1x1x512xf32> to vector<1x512xf32>
    %105 = vector.broadcast %104 : vector<1x512xf32> to vector<2x512xf32>
    %106 = arith.addf %102, %105 : vector<2x512xf32>
    %107 = vector.extract_strided_slice %106 {offsets = [0, 0], sizes = [2, 128], strides = [1, 1]} : vector<2x512xf32> to vector<2x128xf32>
    %108 = arith.negf %107 : vector<2x128xf32>
    %109 = math.exp %108 : vector<2x128xf32>
    %cst_39 = arith.constant 1.000000e+00 : f32
    %110 = vector.broadcast %cst_39 : f32 to vector<2x128xf32>
    %111 = arith.addf %110, %109 : vector<2x128xf32>
    %112 = arith.divf %110, %111 : vector<2x128xf32>
    %113 = vector.extract_strided_slice %106 {offsets = [0, 128], sizes = [2, 128], strides = [1, 1]} : vector<2x512xf32> to vector<2x128xf32>
    %114 = arith.negf %113 : vector<2x128xf32>
    %115 = math.exp %114 : vector<2x128xf32>
    %cst_40 = arith.constant 1.000000e+00 : f32
    %116 = vector.broadcast %cst_40 : f32 to vector<2x128xf32>
    %117 = arith.addf %116, %115 : vector<2x128xf32>
    %118 = arith.divf %116, %117 : vector<2x128xf32>
    %119 = vector.extract_strided_slice %106 {offsets = [0, 256], sizes = [2, 128], strides = [1, 1]} : vector<2x512xf32> to vector<2x128xf32>
    %120 = vector.extract_strided_slice %106 {offsets = [0, 384], sizes = [2, 128], strides = [1, 1]} : vector<2x512xf32> to vector<2x128xf32>
    %121 = arith.mulf %112, %120 : vector<2x128xf32>
    %122 = arith.addf %119, %121 : vector<2x128xf32>
    %123 = math.tanh %122 : vector<2x128xf32>
    %cst_41 = arith.constant 1.000000e+00 : f32
    %124 = vector.broadcast %cst_41 : f32 to vector<2x128xf32>
    %125 = arith.subf %124, %118 : vector<2x128xf32>
    %126 = arith.mulf %125, %123 : vector<2x128xf32>
    %127 = arith.mulf %118, %97 : vector<2x128xf32>
    %128 = arith.addf %126, %127 : vector<2x128xf32>
    %129 = tpu.concatenate %32, %64, %96, %128 in 1 : vector<2x128xf32>, vector<2x128xf32>, vector<2x128xf32>, vector<2x128xf32> -> vector<2x512xf32>
    %c0_42 = arith.constant 0 : index
    %c0_43 = arith.constant 0 : index
    %130 = vector.load %arg7[%c0_42, %c0_43] : memref<2x512xf32, #tpu.memory_space<vmem>>, vector<2x512xf32>
    tpu.vector_store %arg7[%c0_42, %c0_43], %129 {strides = array<i32>} : memref<2x512xf32, #tpu.memory_space<vmem>>, vector<2x512xf32>,
    %131 = arith.truncf %128 : vector<2x128xf32> to vector<2x128xbf16>
    %c0_44 = arith.constant 0 : index
    %c0_45 = arith.constant 0 : index
    %132 = vector.load %arg4[%c0_44, %c0_45] : memref<128x128xbf16, #tpu.memory_space<vmem>>, vector<128x128xbf16>
    %cst_46 = arith.constant dense<0.000000e+00> : vector<2x128xf32>
    %133 = tpu.matmul %131, %132, %cst_46 {dimension_numbers = #tpu.dot_dimension_numbers<[1], [0], [0], [1], [0, 0, 1, 1], [], []>} : vector<2x128xbf16>, vector<128x128xbf16>, vector<2x128xf32> -> vector<2x128xf32>
    %c0_47 = arith.constant 0 : index
    %c0_48 = arith.constant 0 : index
    %134 = vector.load %arg5[%c0_47, %c0_48] : memref<1x128xf32, #tpu.memory_space<vmem>>, vector<1x128xf32>
    %135 = vector.broadcast %134 : vector<1x128xf32> to vector<2x128xf32>
    %136 = arith.addf %133, %135 : vector<2x128xf32>
    %c0_49 = arith.constant 0 : index
    %c0_50 = arith.constant 0 : index
    %137 = vector.load %arg6[%c0_49, %c0_50] : memref<2x128xf32, #tpu.memory_space<vmem>>, vector<2x128xf32>
    tpu.vector_store %arg6[%c0_49, %c0_50], %136 {strides = array<i32>} : memref<2x128xf32, #tpu.memory_space<vmem>>, vector<2x128xf32>,
    return
  }
}

</mosaic_0001>

<llo_original>
// kernel: recurrent_policy_forward.1
$region0: #{recurrent_policy_forward.1}
  #allocation0 [shape = 'u32[]', space=smem, size = 0x4, offset = 0x4, fixed_abs, tag = 'smem constant byte address 0x4 - core index']
  #allocation1 [shape = 'u32[72,128]{1,0:T(1,128)}', space=vmem, size = 0x9000, scoped, tag = 'internal scratch']
  %s0 = inlined_call_operand.vmem [shape: f32[2,128], index: 0, kind: input, shape index: {}]
  %s1 = inlined_call_operand.vmem [shape: f32[2,512], index: 1, kind: input, shape index: {}, may-alias: {1,7}]
  %s2 = inlined_call_operand.hbm [shape: bf16[4,256,512], index: 2, kind: input, shape index: {}]
  %s3 = inlined_call_operand.hbm [shape: f32[4,1,512], index: 3, kind: input, shape index: {}]
  %s4 = inlined_call_operand.hbm [shape: bf16[128,128], index: 4, kind: input, shape index: {}]
  %s5 = inlined_call_operand.vmem [shape: f32[1,128], index: 5, kind: input, shape index: {}]
  %s6 = inlined_call_operand.hbm [shape: f32[2,128], index: 6, kind: output, shape index: {0}]
  %s7 = inlined_call_operand.vmem [shape: f32[2,512], index: 7, kind: output, shape index: {1}, may-alias: {1,7}]
  %8 = xla_tuple %s6, %s7
  %s9 = sld [smem:[#allocation0]]
  $region54: #{recurrent_policy_forward.1} parent=0
    _
  %s11 = ssub.s32 1, %s9
  %s12 = scalar_select 0, %s11, %s9
  $region1: #{recurrent_policy_forward.1} parent=0
    #allocation2 [shape = 'u8[1048576]{0}', space=vmem, size = 0x100000, scoped, tag = 'input window, operand 2, single buffered']
    #allocation3 [shape = 's32[1]{0}', space=sflag, size = 0x4, scoped, tag = 'scoped memory for recurrent_policy_forward.1']
    #allocation4 [shape = 's32[1]{0}', space=sflag, size = 0x4, scoped, tag = 'scoped memory for recurrent_policy_forward.1']
    #allocation5 [shape = 'u8[8192]{0}', space=vmem, size = 0x2000, scoped, tag = 'input window, operand 3, single buffered']
    #allocation6 [shape = 's32[1]{0}', space=sflag, size = 0x4, scoped, tag = 'scoped memory for recurrent_policy_forward.1']
    #allocation7 [shape = 'u8[32768]{0}', space=vmem, size = 0x8000, scoped, tag = 'input window, operand 4, single buffered']
    #allocation8 [shape = 'u8[1024]{0}', space=vmem, size = 0x400, scoped, tag = 'output window, operand 0, single buffered']
    %13 = vsyncpa [#allocation3], 0
    %14 = vsyncpa [#allocation6], 0
    %15 = vsyncpa [#allocation4], 0
    // Predicated region
    $region2: #{recurrent_policy_forward.1} parent=1 // pred_check
      _
    $region3: #{recurrent_policy_forward.1} parent=1 // pred_check_branch
      %17 = sbr.rel (0) target = $region5
    $region4: #{recurrent_policy_forward.1} parent=1 // pred_region
      _
    $region5: #{recurrent_policy_forward.1} parent=1 // pred_fallthru
      _
    // Predicated region
    $region6: #{recurrent_policy_forward.1} parent=1 // pred_check
      _
    $region7: #{recurrent_policy_forward.1} parent=1 // pred_check_branch
      %19 = sbr.rel (0) target = $region9
    $region8: #{recurrent_policy_forward.1} parent=1 // pred_region
      _
    $region9: #{recurrent_policy_forward.1} parent=1 // pred_fallthru
      _
    // Predicated region
    $region10: #{recurrent_policy_forward.1} parent=1 // pred_check
      _
    $region11: #{recurrent_policy_forward.1} parent=1 // pred_check_branch
      %21 = sbr.rel (0) target = $region13
    $region12: #{recurrent_policy_forward.1} parent=1 // pred_region
      %23 = vsyncadd [#allocation3], 0
      %s24 = sshll.u32 %s2, 4
      %s25 = int_to_ptr.hbm [resolvable:$true] %s24
      %s26 = sshll.u32 [#allocation2], 4
      %s27 = int_to_ptr.vmem [resolvable:$true] %s26
      %32 = dma.hbm_to_vmem [thread:$0]  %s25, 32768, %s27, [#allocation3], 256, 256, 16
    $region13: #{recurrent_policy_forward.1} parent=1 // pred_fallthru
      _
    // Predicated region
    $region14: #{recurrent_policy_forward.1} parent=1 // pred_check
      _
    $region15: #{recurrent_policy_forward.1} parent=1 // pred_check_branch
      %34 = sbr.rel (0) target = $region17
    $region16: #{recurrent_policy_forward.1} parent=1 // pred_region
      %36 = vsyncadd [#allocation6], 0
      %s37 = sshll.u32 %s3, 4
      %s38 = int_to_ptr.hbm [resolvable:$true] %s37
      %s39 = sshll.u32 [#allocation5], 4
      %s40 = int_to_ptr.vmem [resolvable:$true] %s39
      %45 = dma.hbm_to_vmem [thread:$0]  %s38, 256, %s40, [#allocation6], 64, 64, 4
    $region17: #{recurrent_policy_forward.1} parent=1 // pred_fallthru
      _
    // Predicated region
    $region18: #{recurrent_policy_forward.1} parent=1 // pred_check
      _
    $region19: #{recurrent_policy_forward.1} parent=1 // pred_check_branch
      %47 = sbr.rel (0) target = $region21
    $region20: #{recurrent_policy_forward.1} parent=1 // pred_region
      %49 = vsyncadd [#allocation6], 0
      %s50 = sshll.u32 %s4, 4
      %s51 = int_to_ptr.hbm [resolvable:$true] %s50
      %s52 = sshll.u32 [#allocation7], 4
      %s53 = int_to_ptr.vmem [resolvable:$true] %s52
      %58 = dma.hbm_to_vmem [thread:$0]  %s51, 1024, %s53, [#allocation6], 64, 64, 4
    $region21: #{recurrent_policy_forward.1} parent=1 // pred_fallthru
      _
    // Predicated region
    $region22: #{recurrent_policy_forward.1} parent=1 // pred_check
      _
    $region23: #{recurrent_policy_forward.1} parent=1 // pred_check_branch
      %60 = sbr.rel (0) target = $region25
    $region24: #{recurrent_policy_forward.1} parent=1 // pred_region
      _
    $region25: #{recurrent_policy_forward.1} parent=1 // pred_fallthru
      _
    // Predicated region
    $region26: #{recurrent_policy_forward.1} parent=1 // pred_check
      _
    $region27: #{recurrent_policy_forward.1} parent=1 // pred_check_branch
      %62 = sbr.rel (0) target = $region29
    $region28: #{recurrent_policy_forward.1} parent=1 // pred_region
      %64 = dma.done [#allocation3], 32768
    $region29: #{recurrent_policy_forward.1} parent=1 // pred_fallthru
      _
    // Predicated region
    $region30: #{recurrent_policy_forward.1} parent=1 // pred_check
      _
    $region31: #{recurrent_policy_forward.1} parent=1 // pred_check_branch
      %66 = sbr.rel (0) target = $region33
    $region32: #{recurrent_policy_forward.1} parent=1 // pred_region
      %68 = dma.done [#allocation6], 256
    $region33: #{recurrent_policy_forward.1} parent=1 // pred_fallthru
      _
    // Predicated region
    $region34: #{recurrent_policy_forward.1} parent=1 // pred_check
      _
    $region35: #{recurrent_policy_forward.1} parent=1 // pred_check_branch
      %70 = sbr.rel (0) target = $region37
    $region36: #{recurrent_policy_forward.1} parent=1 // pred_region
      %72 = dma.done [#allocation6], 1024
    $region37: #{recurrent_policy_forward.1} parent=1 // pred_fallthru
      _
    %v73 = vld [vmem:[%s0] sm:$0x3]
    %v74 = vld [vmem:[%s1] sm:$0x3]
    %v75 = vpack.c.bf16 %v73, %v73
    %v76 = vpack.c.bf16 %v74, %v74
    %v77 = vld [vmem:[#allocation2] sm:$0xff]
    %v78 = vld [vmem:[#allocation2 + $0x8] sm:$0xff]
    %v79 = vld [vmem:[#allocation2 + $0x10] sm:$0xff]
    %v80 = vld [vmem:[#allocation2 + $0x18] sm:$0xff]
    %v81 = vld [vmem:[#allocation2 + $0x20] sm:$0xff]
    %v82 = vld [vmem:[#allocation2 + $0x28] sm:$0xff]
    %v83 = vld [vmem:[#allocation2 + $0x30] sm:$0xff]
    %v84 = vld [vmem:[#allocation2 + $0x38] sm:$0xff]
    %v85 = vld [vmem:[#allocation2 + $0x40] sm:$0xff]
    %v86 = vld [vmem:[#allocation2 + $0x48] sm:$0xff]
    %v87 = vld [vmem:[#allocation2 + $0x50] sm:$0xff]
    %v88 = vld [vmem:[#allocation2 + $0x58] sm:$0xff]
    %v89 = vld [vmem:[#allocation2 + $0x60] sm:$0xff]
    %v90 = vld [vmem:[#allocation2 + $0x68] sm:$0xff]
    %v91 = vld [vmem:[#allocation2 + $0x70] sm:$0xff]
    %v92 = vld [vmem:[#allocation2 + $0x78] sm:$0xff]
    %v93 = vld [vmem:[#allocation2 + $0x80] sm:$0xff]
    %v94 = vld [vmem:[#allocation2 + $0x88] sm:$0xff]
    %v95 = vld [vmem:[#allocation2 + $0x90] sm:$0xff]
    %v96 = vld [vmem:[#allocation2 + $0x98] sm:$0xff]
    %v97 = vld [vmem:[#allocation2 + $0xa0] sm:$0xff]
    %v98 = vld [vmem:[#allocation2 + $0xa8] sm:$0xff]
    %v99 = vld [vmem:[#allocation2 + $0xb0] sm:$0xff]
    %v100 = vld [vmem:[#allocation2 + $0xb8] sm:$0xff]
    %v101 = vld [vmem:[#allocation2 + $0xc0] sm:$0xff]
    %v102 = vld [vmem:[#allocation2 + $0xc8] sm:$0xff]
    %v103 = vld [vmem:[#allocation2 + $0xd0] sm:$0xff]
    %v104 = vld [vmem:[#allocation2 + $0xd8] sm:$0xff]
    %v105 = vld [vmem:[#allocation2 + $0xe0] sm:$0xff]
    %v106 = vld [vmem:[#allocation2 + $0xe8] sm:$0xff]
    %v107 = vld [vmem:[#allocation2 + $0xf0] sm:$0xff]
    %v108 = vld [vmem:[#allocation2 + $0xf8] sm:$0xff]
    %v109 = vld [vmem:[#allocation2 + $0x100] sm:$0xff]
    %v110 = vld [vmem:[#allocation2 + $0x108] sm:$0xff]
    %v111 = vld [vmem:[#allocation2 + $0x110] sm:$0xff]
    %v112 = vld [vmem:[#allocation2 + $0x118] sm:$0xff]
    %v113 = vld [vmem:[#allocation2 + $0x120] sm:$0xff]
    %v114 = vld [vmem:[#allocation2 + $0x128] sm:$0xff]
    %v115 = vld [vmem:[#allocation2 + $0x130] sm:$0xff]
    %v116 = vld [vmem:[#allocation2 + $0x138] sm:$0xff]
    %v117 = vld [vmem:[#allocation2 + $0x140] sm:$0xff]
    %v118 = vld [vmem:[#allocation2 + $0x148] sm:$0xff]
    %v119 = vld [vmem:[#allocation2 + $0x150] sm:$0xff]
    %v120 = vld [vmem:[#allocation2 + $0x158] sm:$0xff]
    %v121 = vld [vmem:[#allocation2 + $0x160] sm:$0xff]
    %v122 = vld [vmem:[#allocation2 + $0x168] sm:$0xff]
    %v123 = vld [vmem:[#allocation2 + $0x170] sm:$0xff]
    %v124 = vld [vmem:[#allocation2 + $0x178] sm:$0xff]
    %v125 = vld [vmem:[#allocation2 + $0x180] sm:$0xff]
    %v126 = vld [vmem:[#allocation2 + $0x188] sm:$0xff]
    %v127 = vld [vmem:[#allocation2 + $0x190] sm:$0xff]
    %v128 = vld [vmem:[#allocation2 + $0x198] sm:$0xff]
    %v129 = vld [vmem:[#allocation2 + $0x1a0] sm:$0xff]
    %v130 = vld [vmem:[#allocation2 + $0x1a8] sm:$0xff]
    %v131 = vld [vmem:[#allocation2 + $0x1b0] sm:$0xff]
    %v132 = vld [vmem:[#allocation2 + $0x1b8] sm:$0xff]
    %v133 = vld [vmem:[#allocation2 + $0x1c0] sm:$0xff]
    %v134 = vld [vmem:[#allocation2 + $0x1c8] sm:$0xff]
    %v135 = vld [vmem:[#allocation2 + $0x1d0] sm:$0xff]
    %v136 = vld [vmem:[#allocation2 + $0x1d8] sm:$0xff]
    %v137 = vld [vmem:[#allocation2 + $0x1e0] sm:$0xff]
    %v138 = vld [vmem:[#allocation2 + $0x1e8] sm:$0xff]
    %v139 = vld [vmem:[#allocation2 + $0x1f0] sm:$0xff]
    %v140 = vld [vmem:[#allocation2 + $0x1f8] sm:$0xff]
    %v141 = vld [vmem:[#allocation5] sm:$0xf]
    %v143 = vperm.slane %v141, 0
    %v144 = vperm.slane %v141, 1
    %v145 = vperm.slane %v141, 2
    %v146 = vperm.slane %v141, 3
    %v215 = vunpack.c.l.b16 %v77
    %v216 = vunpack.c.h.b16 %v77
    %v217 = vunpack.c.l.b16 %v78
    %v218 = vunpack.c.h.b16 %v78
    %v219 = vunpack.c.l.b16 %v79
    %v220 = vunpack.c.h.b16 %v79
    %v221 = vunpack.c.l.b16 %v80
    %v222 = vunpack.c.h.b16 %v80
    %v223 = vunpack.c.l.b16 %v81
    %v224 = vunpack.c.h.b16 %v81
    %v225 = vunpack.c.l.b16 %v82
    %v226 = vunpack.c.h.b16 %v82
    %v227 = vunpack.c.l.b16 %v83
    %v228 = vunpack.c.h.b16 %v83
    %v229 = vunpack.c.l.b16 %v84
    %v230 = vunpack.c.h.b16 %v84
    %v231 = vunpack.c.l.b16 %v85
    %v232 = vunpack.c.h.b16 %v85
    %v233 = vunpack.c.l.b16 %v86
    %v234 = vunpack.c.h.b16 %v86
    %v235 = vunpack.c.l.b16 %v87
    %v236 = vunpack.c.h.b16 %v87
    %v237 = vunpack.c.l.b16 %v88
    %v238 = vunpack.c.h.b16 %v88
    %v239 = vunpack.c.l.b16 %v89
    %v240 = vunpack.c.h.b16 %v89
    %v241 = vunpack.c.l.b16 %v90
    %v242 = vunpack.c.h.b16 %v90
    %v243 = vunpack.c.l.b16 %v91
    %v244 = vunpack.c.h.b16 %v91
    %v245 = vunpack.c.l.b16 %v92
    %v246 = vunpack.c.h.b16 %v92
    %v247 = vunpack.c.l.b16 %v93
    %v248 = vunpack.c.h.b16 %v93
    %v249 = vunpack.c.l.b16 %v94
    %v250 = vunpack.c.h.b16 %v94
    %v251 = vunpack.c.l.b16 %v95
    %v252 = vunpack.c.h.b16 %v95
    %v253 = vunpack.c.l.b16 %v96
    %v254 = vunpack.c.h.b16 %v96
    %v255 = vunpack.c.l.b16 %v97
    %v256 = vunpack.c.h.b16 %v97
    %v257 = vunpack.c.l.b16 %v98
    %v258 = vunpack.c.h.b16 %v98
    %v259 = vunpack.c.l.b16 %v99
    %v260 = vunpack.c.h.b16 %v99
    %v261 = vunpack.c.l.b16 %v100
    %v262 = vunpack.c.h.b16 %v100
    %v263 = vunpack.c.l.b16 %v101
    %v264 = vunpack.c.h.b16 %v101
    %v265 = vunpack.c.l.b16 %v102
    %v266 = vunpack.c.h.b16 %v102
    %v267 = vunpack.c.l.b16 %v103
    %v268 = vunpack.c.h.b16 %v103
    %v269 = vunpack.c.l.b16 %v104
    %v270 = vunpack.c.h.b16 %v104
    %v271 = vunpack.c.l.b16 %v105
    %v272 = vunpack.c.h.b16 %v105
    %v273 = vunpack.c.l.b16 %v106
    %v274 = vunpack.c.h.b16 %v106
    %v275 = vunpack.c.l.b16 %v107
    %v276 = vunpack.c.h.b16 %v107
    %v277 = vunpack.c.l.b16 %v108
    %v278 = vunpack.c.h.b16 %v108
    %v279 = vunpack.c.l.b16 %v109
    %v280 = vunpack.c.h.b16 %v109
    %v281 = vunpack.c.l.b16 %v110
    %v282 = vunpack.c.h.b16 %v110
    %v283 = vunpack.c.l.b16 %v111
    %v284 = vunpack.c.h.b16 %v111
    %v285 = vunpack.c.l.b16 %v112
    %v286 = vunpack.c.h.b16 %v112
    %v287 = vunpack.c.l.b16 %v113
    %v288 = vunpack.c.h.b16 %v113
    %v289 = vunpack.c.l.b16 %v114
    %v290 = vunpack.c.h.b16 %v114
    %v291 = vunpack.c.l.b16 %v115
    %v292 = vunpack.c.h.b16 %v115
    %v293 = vunpack.c.l.b16 %v116
    %v294 = vunpack.c.h.b16 %v116
    %v295 = vunpack.c.l.b16 %v117
    %v296 = vunpack.c.h.b16 %v117
    %v297 = vunpack.c.l.b16 %v118
    %v298 = vunpack.c.h.b16 %v118
    %v299 = vunpack.c.l.b16 %v119
    %v300 = vunpack.c.h.b16 %v119
    %v301 = vunpack.c.l.b16 %v120
    %v302 = vunpack.c.h.b16 %v120
    %v303 = vunpack.c.l.b16 %v121
    %v304 = vunpack.c.h.b16 %v121
    %v305 = vunpack.c.l.b16 %v122
    %v306 = vunpack.c.h.b16 %v122
    %v307 = vunpack.c.l.b16 %v123
    %v308 = vunpack.c.h.b16 %v123
    %v309 = vunpack.c.l.b16 %v124
    %v310 = vunpack.c.h.b16 %v124
    %v311 = vunpack.c.l.b16 %v125
    %v312 = vunpack.c.h.b16 %v125
    %v313 = vunpack.c.l.b16 %v126
    %v314 = vunpack.c.h.b16 %v126
    %v315 = vunpack.c.l.b16 %v127
    %v316 = vunpack.c.h.b16 %v127
    %v317 = vunpack.c.l.b16 %v128
    %v318 = vunpack.c.h.b16 %v128
    %v319 = vunpack.c.l.b16 %v129
    %v320 = vunpack.c.h.b16 %v129
    %v321 = vunpack.c.l.b16 %v130
    %v322 = vunpack.c.h.b16 %v130
    %v323 = vunpack.c.l.b16 %v131
    %v324 = vunpack.c.h.b16 %v131
    %v325 = vunpack.c.l.b16 %v132
    %v326 = vunpack.c.h.b16 %v132
    %v327 = vunpack.c.l.b16 %v133
    %v328 = vunpack.c.h.b16 %v133
    %v329 = vunpack.c.l.b16 %v134
    %v330 = vunpack.c.h.b16 %v134
    %v331 = vunpack.c.l.b16 %v135
    %v332 = vunpack.c.h.b16 %v135
    %v333 = vunpack.c.l.b16 %v136
    %v334 = vunpack.c.h.b16 %v136
    %v335 = vunpack.c.l.b16 %v137
    %v336 = vunpack.c.h.b16 %v137
    %v337 = vunpack.c.l.b16 %v138
    %v338 = vunpack.c.h.b16 %v138
    %v339 = vunpack.c.l.b16 %v139
    %v340 = vunpack.c.h.b16 %v139
    %v341 = vunpack.c.l.b16 %v140
    %v342 = vunpack.c.h.b16 %v140
    %v343 = vpack.c.b16 %v219, %v215
    %v344 = vpack.c.b16 %v220, %v216
    %v345 = vpack.c.b16 %v221, %v217
    %v346 = vpack.c.b16 %v222, %v218
    %v347 = vpack.c.b16 %v227, %v223
    %v348 = vpack.c.b16 %v228, %v224
    %v349 = vpack.c.b16 %v229, %v225
    %v350 = vpack.c.b16 %v230, %v226
    %v351 = vpack.c.b16 %v235, %v231
    %v352 = vpack.c.b16 %v236, %v232
    %v353 = vpack.c.b16 %v237, %v233
    %v354 = vpack.c.b16 %v238, %v234
    %v355 = vpack.c.b16 %v243, %v239
    %v356 = vpack.c.b16 %v244, %v240
    %v357 = vpack.c.b16 %v245, %v241
    %v358 = vpack.c.b16 %v246, %v242
    %v359 = vpack.c.b16 %v251, %v247
    %v360 = vpack.c.b16 %v252, %v248
    %v361 = vpack.c.b16 %v253, %v249
    %v362 = vpack.c.b16 %v254, %v250
    %v363 = vpack.c.b16 %v259, %v255
    %v364 = vpack.c.b16 %v260, %v256
    %v365 = vpack.c.b16 %v261, %v257
    %v366 = vpack.c.b16 %v262, %v258
    %v367 = vpack.c.b16 %v267, %v263
    %v368 = vpack.c.b16 %v268, %v264
    %v369 = vpack.c.b16 %v269, %v265
    %v370 = vpack.c.b16 %v270, %v266
    %v371 = vpack.c.b16 %v275, %v271
    %v372 = vpack.c.b16 %v276, %v272
    %v373 = vpack.c.b16 %v277, %v273
    %v374 = vpack.c.b16 %v278, %v274
    %v375 = vpack.c.b16 %v283, %v279
    %v376 = vpack.c.b16 %v284, %v280
    %v377 = vpack.c.b16 %v285, %v281
    %v378 = vpack.c.b16 %v286, %v282
    %v379 = vpack.c.b16 %v291, %v287
    %v380 = vpack.c.b16 %v292, %v288
    %v381 = vpack.c.b16 %v293, %v289
    %v382 = vpack.c.b16 %v294, %v290
    %v383 = vpack.c.b16 %v299, %v295
    %v384 = vpack.c.b16 %v300, %v296
    %v385 = vpack.c.b16 %v301, %v297
    %v386 = vpack.c.b16 %v302, %v298
    %v387 = vpack.c.b16 %v307, %v303
    %v388 = vpack.c.b16 %v308, %v304
    %v389 = vpack.c.b16 %v309, %v305
    %v390 = vpack.c.b16 %v310, %v306
    %v391 = vpack.c.b16 %v315, %v311
    %v392 = vpack.c.b16 %v316, %v312
    %v393 = vpack.c.b16 %v317, %v313
    %v394 = vpack.c.b16 %v318, %v314
    %v395 = vpack.c.b16 %v323, %v319
    %v396 = vpack.c.b16 %v324, %v320
    %v397 = vpack.c.b16 %v325, %v321
    %v398 = vpack.c.b16 %v326, %v322
    %v399 = vpack.c.b16 %v331, %v327
    %v400 = vpack.c.b16 %v332, %v328
    %v401 = vpack.c.b16 %v333, %v329
    %v402 = vpack.c.b16 %v334, %v330
    %v403 = vpack.c.b16 %v339, %v335
    %v404 = vpack.c.b16 %v340, %v336
    %v405 = vpack.c.b16 %v341, %v337
    %v406 = vpack.c.b16 %v342, %v338
    %471 = vmatpush.bf16.msra.mxu0 %v371
    %472 = vmatpush.bf16.msra.mxu0 %v367
    %473 = vmatpush.bf16.msra.mxu0 %v363
    %474 = vmatpush.bf16.msra.mxu0 %v359
    %475 = vmatpush.bf16.msra.mxu0 %v355
    %476 = vmatpush.bf16.msra.mxu0 %v351
    %477 = vmatpush.bf16.msra.mxu0 %v347
    %478 = vmatpush.bf16.msra.mxu0 %v343
    %479 = vmatmul.bf16.gmra.mxu0 %v75
    %v480 = vpop.f32.mrf.mxu0
    %v481 = vadd.f32 %v143, %v480
    %v482 = vpop.f32.mrf.mxu0
    %483 = vdwg.mxu0
    %484 = vmatpush.bf16.msra.mxu0 %v403
    %485 = vmatpush.bf16.msra.mxu0 %v399
    %486 = vmatpush.bf16.msra.mxu0 %v395
    %487 = vmatpush.bf16.msra.mxu0 %v391
    %488 = vmatpush.bf16.msra.mxu0 %v387
    %489 = vmatpush.bf16.msra.mxu0 %v383
    %490 = vmatpush.bf16.msra.mxu0 %v379
    %491 = vmatpush.bf16.msra.mxu0 %v375
    %492 = vmatmul.bf16.gmra.mxu0 %v76
    %v493 = vpop.f32.mrf.mxu0
    %v494 = vadd.f32 %v481, %v493
    %v495 = vpop.f32.mrf.mxu0
    %496 = vdwg.mxu0
    %497 = vmatpush.bf16.msra.mxu0 %v372
    %498 = vmatpush.bf16.msra.mxu0 %v368
    %499 = vmatpush.bf16.msra.mxu0 %v364
    %500 = vmatpush.bf16.msra.mxu0 %v360
    %501 = vmatpush.bf16.msra.mxu0 %v356
    %502 = vmatpush.bf16.msra.mxu0 %v352
    %503 = vmatpush.bf16.msra.mxu0 %v348
    %504 = vmatpush.bf16.msra.mxu0 %v344
    %505 = vmatmul.bf16.gmra.mxu0 %v75
    %v506 = vpop.f32.mrf.mxu0
    %v507 = vadd.f32 %v144, %v506
    %v508 = vpop.f32.mrf.mxu0
    %509 = vdwg.mxu0
    %510 = vmatpush.bf16.msra.mxu0 %v404
    %511 = vmatpush.bf16.msra.mxu0 %v400
    %512 = vmatpush.bf16.msra.mxu0 %v396
    %513 = vmatpush.bf16.msra.mxu0 %v392
    %514 = vmatpush.bf16.msra.mxu0 %v388
    %515 = vmatpush.bf16.msra.mxu0 %v384
    %516 = vmatpush.bf16.msra.mxu0 %v380
    %517 = vmatpush.bf16.msra.mxu0 %v376
    %518 = vmatmul.bf16.gmra.mxu0 %v76
    %v519 = vpop.f32.mrf.mxu0
    %v520 = vadd.f32 %v507, %v519
    %v521 = vpop.f32.mrf.mxu0
    %522 = vdwg.mxu0
    %523 = vmatpush.bf16.msra.mxu0 %v373
    %524 = vmatpush.bf16.msra.mxu0 %v369
    %525 = vmatpush.bf16.msra.mxu0 %v365
    %526 = vmatpush.bf16.msra.mxu0 %v361
    %527 = vmatpush.bf16.msra.mxu0 %v357
    %528 = vmatpush.bf16.msra.mxu0 %v353
    %529 = vmatpush.bf16.msra.mxu0 %v349
    %530 = vmatpush.bf16.msra.mxu0 %v345
    %531 = vmatmul.bf16.gmra.mxu0 %v75
    %v532 = vpop.f32.mrf.mxu0
    %v533 = vadd.f32 %v145, %v532
    %v534 = vpop.f32.mrf.mxu0
    %535 = vdwg.mxu0
    %536 = vmatpush.bf16.msra.mxu0 %v405
    %537 = vmatpush.bf16.msra.mxu0 %v401
    %538 = vmatpush.bf16.msra.mxu0 %v397
    %539 = vmatpush.bf16.msra.mxu0 %v393
    %540 = vmatpush.bf16.msra.mxu0 %v389
    %541 = vmatpush.bf16.msra.mxu0 %v385
    %542 = vmatpush.bf16.msra.mxu0 %v381
    %543 = vmatpush.bf16.msra.mxu0 %v377
    %544 = vmatmul.bf16.gmra.mxu0 %v76
    %v545 = vpop.f32.mrf.mxu0
    %v546 = vadd.f32 %v533, %v545
    %v547 = vpop.f32.mrf.mxu0
    %548 = vdwg.mxu0
    %549 = vmatpush.bf16.msra.mxu0 %v374
    %550 = vmatpush.bf16.msra.mxu0 %v370
    %551 = vmatpush.bf16.msra.mxu0 %v366
    %552 = vmatpush.bf16.msra.mxu0 %v362
    %553 = vmatpush.bf16.msra.mxu0 %v358
    %554 = vmatpush.bf16.msra.mxu0 %v354
    %555 = vmatpush.bf16.msra.mxu0 %v350
    %556 = vmatpush.bf16.msra.mxu0 %v346
    %557 = vmatmul.bf16.gmra.mxu0 %v75
    %v558 = vpop.f32.mrf.mxu0
    %v559 = vadd.f32 %v146, %v558
    %v560 = vpop.f32.mrf.mxu0
    %561 = vdwg.mxu0
    %562 = vmatpush.bf16.msra.mxu0 %v406
    %563 = vmatpush.bf16.msra.mxu0 %v402
    %564 = vmatpush.bf16.msra.mxu0 %v398
    %565 = vmatpush.bf16.msra.mxu0 %v394
    %566 = vmatpush.bf16.msra.mxu0 %v390
    %567 = vmatpush.bf16.msra.mxu0 %v386
    %568 = vmatpush.bf16.msra.mxu0 %v382
    %569 = vmatpush.bf16.msra.mxu0 %v378
    %570 = vmatmul.bf16.gmra.mxu0 %v76
    %v571 = vpop.f32.mrf.mxu0
    %v572 = vadd.f32 %v559, %v571
    %v573 = vpop.f32.mrf.mxu0
    %574 = vdwg.mxu0
    %v575 = vxor.u32 %v494, 2147483648
    %v576 = vmul.f32 %v575, 1.442695
    %v577 = vpow.pop %v576
    %v578 = vadd.f32 %v577, 1.0
    %v579 = vrcp.pop %v578
    %v580 = vmul.f32 %v578, %v579
    %v581 = vsub.f32 1.0, %v580
    %v582 = vmul.f32 %v579, %v581
    %v583 = vadd.f32 %v579, %v582
    %vm584 = vweird.f32 %v578
    %vm585 = vweird.f32 %v579
    %vm586 = vmor %vm584, %vm585
    %v587 = vsel %vm586, %v579, %v583
    %v588 = vand.u32 2147483647, %v578
    %vm589 = vcmp.eq.f32.partialorder %v588, 8.507059e+37
    %v590 = vand.u32 %v578, 2147483648
    %v591 = vor.u32 1.1754944e-38, %v590
    %v592 = vsel %vm589, %v591, %v587
    %v593 = vmul.f32 1.0, %v592
    %v594 = vxor.u32 %v520, 2147483648
    %v595 = vmul.f32 %v594, 1.442695
    %v596 = vpow.pop %v595
    %v597 = vadd.f32 %v596, 1.0
    %v598 = vrcp.pop %v597
    %v599 = vmul.f32 %v597, %v598
    %v600 = vsub.f32 1.0, %v599
    %v601 = vmul.f32 %v598, %v600
    %v602 = vadd.f32 %v598, %v601
    %vm603 = vweird.f32 %v597
    %vm604 = vweird.f32 %v598
    %vm605 = vmor %vm603, %vm604
    %v606 = vsel %vm605, %v598, %v602
    %v607 = vand.u32 2147483647, %v597
    %vm608 = vcmp.eq.f32.partialorder %v607, 8.507059e+37
    %v609 = vand.u32 %v597, 2147483648
    %v610 = vor.u32 1.1754944e-38, %v609
    %v611 = vsel %vm608, %v610, %v606
    %v612 = vmul.f32 1.0, %v611
    %v613 = vmul.f32 %v593, %v572
    %v614 = vadd.f32 %v546, %v613
    %v615 = vtanh.pop %v614
    %v616 = vsub.f32 1.0, %v612
    %v617 = vmul.f32 %v616, %v615
    %v618 = vmul.f32 %v612, %v74
    %v619 = vadd.f32 %v617, %v618
    %v620 = vld [vmem:[%s1 + $0x2] sm:$0x3]
    %v621 = vpack.c.bf16 %v619, %v619
    %v622 = vpack.c.bf16 %v620, %v620
    %s623 = scalar_lea.vmem [#allocation2], 512
    %v624 = vld [vmem:[%s623] sm:$0xff]
    %v625 = vld [vmem:[%s623 + $0x8] sm:$0xff]
    %v626 = vld [vmem:[%s623 + $0x10] sm:$0xff]
    %v627 = vld [vmem:[%s623 + $0x18] sm:$0xff]
    %v628 = vld [vmem:[%s623 + $0x20] sm:$0xff]
    %v629 = vld [vmem:[%s623 + $0x28] sm:$0xff]
    %v630 = vld [vmem:[%s623 + $0x30] sm:$0xff]
    %v631 = vld [vmem:[%s623 + $0x38] sm:$0xff]
    %v632 = vld [vmem:[%s623 + $0x40] sm:$0xff]
    %v633 = vld [vmem:[%s623 + $0x48] sm:$0xff]
    %v634 = vld [vmem:[%s623 + $0x50] sm:$0xff]
    %v635 = vld [vmem:[%s623 + $0x58] sm:$0xff]
    %v636 = vld [vmem:[%s623 + $0x60] sm:$0xff]
    %v637 = vld [vmem:[%s623 + $0x68] sm:$0xff]
    %v638 = vld [vmem:[%s623 + $0x70] sm:$0xff]
    %v639 = vld [vmem:[%s623 + $0x78] sm:$0xff]
    %v640 = vld [vmem:[%s623 + $0x80] sm:$0xff]
    %v641 = vld [vmem:[%s623 + $0x88] sm:$0xff]
    %v642 = vld [vmem:[%s623 + $0x90] sm:$0xff]
    %v643 = vld [vmem:[%s623 + $0x98] sm:$0xff]
    %v644 = vld [vmem:[%s623 + $0xa0] sm:$0xff]
    %v645 = vld [vmem:[%s623 + $0xa8] sm:$0xff]
    %v646 = vld [vmem:[%s623 + $0xb0] sm:$0xff]
    %v647 = vld [vmem:[%s623 + $0xb8] sm:$0xff]
    %v648 = vld [vmem:[%s623 + $0xc0] sm:$0xff]
    %v649 = vld [vmem:[%s623 + $0xc8] sm:$0xff]
    %v650 = vld [vmem:[%s623 + $0xd0] sm:$0xff]
    %v651 = vld [vmem:[%s623 + $0xd8] sm:$0xff]
    %v652 = vld [vmem:[%s623 + $0xe0] sm:$0xff]
    %v653 = vld [vmem:[%s623 + $0xe8] sm:$0xff]
    %v654 = vld [vmem:[%s623 + $0xf0] sm:$0xff]
    %v655 = vld [vmem:[%s623 + $0xf8] sm:$0xff]
    %v656 = vld [vmem:[%s623 + $0x100] sm:$0xff]
    %v657 = vld [vmem:[%s623 + $0x108] sm:$0xff]
    %v658 = vld [vmem:[%s623 + $0x110] sm:$0xff]
    %v659 = vld [vmem:[%s623 + $0x118] sm:$0xff]
    %v660 = vld [vmem:[%s623 + $0x120] sm:$0xff]
    %v661 = vld [vmem:[%s623 + $0x128] sm:$0xff]
    %v662 = vld [vmem:[%s623 + $0x130] sm:$0xff]
    %v663 = vld [vmem:[%s623 + $0x138] sm:$0xff]
    %v664 = vld [vmem:[%s623 + $0x140] sm:$0xff]
    %v665 = vld [vmem:[%s623 + $0x148] sm:$0xff]
    %v666 = vld [vmem:[%s623 + $0x150] sm:$0xff]
    %v667 = vld [vmem:[%s623 + $0x158] sm:$0xff]
    %v668 = vld [vmem:[%s623 + $0x160] sm:$0xff]
    %v669 = vld [vmem:[%s623 + $0x168] sm:$0xff]
    %v670 = vld [vmem:[%s623 + $0x170] sm:$0xff]
    %v671 = vld [vmem:[%s623 + $0x178] sm:$0xff]
    %v672 = vld [vmem:[%s623 + $0x180] sm:$0xff]
    %v673 = vld [vmem:[%s623 + $0x188] sm:$0xff]
    %v674 = vld [vmem:[%s623 + $0x190] sm:$0xff]
    %v675 = vld [vmem:[%s623 + $0x198] sm:$0xff]
    %v676 = vld [vmem:[%s623 + $0x1a0] sm:$0xff]
    %v677 = vld [vmem:[%s623 + $0x1a8] sm:$0xff]
    %v678 = vld [vmem:[%s623 + $0x1b0] sm:$0xff]
    %v679 = vld [vmem:[%s623 + $0x1b8] sm:$0xff]
    %v680 = vld [vmem:[%s623 + $0x1c0] sm:$0xff]
    %v681 = vld [vmem:[%s623 + $0x1c8] sm:$0xff]
    %v682 = vld [vmem:[%s623 + $0x1d0] sm:$0xff]
    %v683 = vld [vmem:[%s623 + $0x1d8] sm:$0xff]
    %v684 = vld [vmem:[%s623 + $0x1e0] sm:$0xff]
    %v685 = vld [vmem:[%s623 + $0x1e8] sm:$0xff]
    %v686 = vld [vmem:[%s623 + $0x1f0] sm:$0xff]
    %v687 = vld [vmem:[%s623 + $0x1f8] sm:$0xff]
    %s688 = scalar_lea.vmem [#allocation5], 4
    %v689 = vld [vmem:[%s688] sm:$0xf]
    %v691 = vperm.slane %v689, 0
    %v692 = vperm.slane %v689, 1
    %v693 = vperm.slane %v689, 2
    %v694 = vperm.slane %v689, 3
    %v763 = vunpack.c.l.b16 %v624
    %v764 = vunpack.c.h.b16 %v624
    %v765 = vunpack.c.l.b16 %v625
    %v766 = vunpack.c.h.b16 %v625
    %v767 = vunpack.c.l.b16 %v626
    %v768 = vunpack.c.h.b16 %v626
    %v769 = vunpack.c.l.b16 %v627
    %v770 = vunpack.c.h.b16 %v627
    %v771 = vunpack.c.l.b16 %v628
    %v772 = vunpack.c.h.b16 %v628
    %v773 = vunpack.c.l.b16 %v629
    %v774 = vunpack.c.h.b16 %v629
    %v775 = vunpack.c.l.b16 %v630
    %v776 = vunpack.c.h.b16 %v630
    %v777 = vunpack.c.l.b16 %v631
    %v778 = vunpack.c.h.b16 %v631
    %v779 = vunpack.c.l.b16 %v632
    %v780 = vunpack.c.h.b16 %v632
    %v781 = vunpack.c.l.b16 %v633
    %v782 = vunpack.c.h.b16 %v633
    %v783 = vunpack.c.l.b16 %v634
    %v784 = vunpack.c.h.b16 %v634
    %v785 = vunpack.c.l.b16 %v635
    %v786 = vunpack.c.h.b16 %v635
    %v787 = vunpack.c.l.b16 %v636
    %v788 = vunpack.c.h.b16 %v636
    %v789 = vunpack.c.l.b16 %v637
    %v790 = vunpack.c.h.b16 %v637
    %v791 = vunpack.c.l.b16 %v638
    %v792 = vunpack.c.h.b16 %v638
    %v793 = vunpack.c.l.b16 %v639
    %v794 = vunpack.c.h.b16 %v639
    %v795 = vunpack.c.l.b16 %v640
    %v796 = vunpack.c.h.b16 %v640
    %v797 = vunpack.c.l.b16 %v641
    %v798 = vunpack.c.h.b16 %v641
    %v799 = vunpack.c.l.b16 %v642
    %v800 = vunpack.c.h.b16 %v642
    %v801 = vunpack.c.l.b16 %v643
    %v802 = vunpack.c.h.b16 %v643
    %v803 = vunpack.c.l.b16 %v644
    %v804 = vunpack.c.h.b16 %v644
    %v805 = vunpack.c.l.b16 %v645
    %v806 = vunpack.c.h.b16 %v645
    %v807 = vunpack.c.l.b16 %v646
    %v808 = vunpack.c.h.b16 %v646
    %v809 = vunpack.c.l.b16 %v647
    %v810 = vunpack.c.h.b16 %v647
    %v811 = vunpack.c.l.b16 %v648
    %v812 = vunpack.c.h.b16 %v648
    %v813 = vunpack.c.l.b16 %v649
    %v814 = vunpack.c.h.b16 %v649
    %v815 = vunpack.c.l.b16 %v650
    %v816 = vunpack.c.h.b16 %v650
    %v817 = vunpack.c.l.b16 %v651
    %v818 = vunpack.c.h.b16 %v651
    %v819 = vunpack.c.l.b16 %v652
    %v820 = vunpack.c.h.b16 %v652
    %v821 = vunpack.c.l.b16 %v653
    %v822 = vunpack.c.h.b16 %v653
    %v823 = vunpack.c.l.b16 %v654
    %v824 = vunpack.c.h.b16 %v654
    %v825 = vunpack.c.l.b16 %v655
    %v826 = vunpack.c.h.b16 %v655
    %v827 = vunpack.c.l.b16 %v656
    %v828 = vunpack.c.h.b16 %v656
    %v829 = vunpack.c.l.b16 %v657
    %v830 = vunpack.c.h.b16 %v657
    %v831 = vunpack.c.l.b16 %v658
    %v832 = vunpack.c.h.b16 %v658
    %v833 = vunpack.c.l.b16 %v659
    %v834 = vunpack.c.h.b16 %v659
    %v835 = vunpack.c.l.b16 %v660
    %v836 = vunpack.c.h.b16 %v660
    %v837 = vunpack.c.l.b16 %v661
    %v838 = vunpack.c.h.b16 %v661
    %v839 = vunpack.c.l.b16 %v662
    %v840 = vunpack.c.h.b16 %v662
    %v841 = vunpack.c.l.b16 %v663
    %v842 = vunpack.c.h.b16 %v663
    %v843 = vunpack.c.l.b16 %v664
    %v844 = vunpack.c.h.b16 %v664
    %v845 = vunpack.c.l.b16 %v665
    %v846 = vunpack.c.h.b16 %v665
    %v847 = vunpack.c.l.b16 %v666
    %v848 = vunpack.c.h.b16 %v666
    %v849 = vunpack.c.l.b16 %v667
    %v850 = vunpack.c.h.b16 %v667
    %v851 = vunpack.c.l.b16 %v668
    %v852 = vunpack.c.h.b16 %v668
    %v853 = vunpack.c.l.b16 %v669
    %v854 = vunpack.c.h.b16 %v669
    %v855 = vunpack.c.l.b16 %v670
    %v856 = vunpack.c.h.b16 %v670
    %v857 = vunpack.c.l.b16 %v671
    %v858 = vunpack.c.h.b16 %v671
    %v859 = vunpack.c.l.b16 %v672
    %v860 = vunpack.c.h.b16 %v672
    %v861 = vunpack.c.l.b16 %v673
    %v862 = vunpack.c.h.b16 %v673
    %v863 = vunpack.c.l.b16 %v674
    %v864 = vunpack.c.h.b16 %v674
    %v865 = vunpack.c.l.b16 %v675
    %v866 = vunpack.c.h.b16 %v675
    %v867 = vunpack.c.l.b16 %v676
    %v868 = vunpack.c.h.b16 %v676
    %v869 = vunpack.c.l.b16 %v677
    %v870 = vunpack.c.h.b16 %v677
    %v871 = vunpack.c.l.b16 %v678
    %v872 = vunpack.c.h.b16 %v678
    %v873 = vunpack.c.l.b16 %v679
    %v874 = vunpack.c.h.b16 %v679
    %v875 = vunpack.c.l.b16 %v680
    %v876 = vunpack.c.h.b16 %v680
    %v877 = vunpack.c.l.b16 %v681
    %v878 = vunpack.c.h.b16 %v681
    %v879 = vunpack.c.l.b16 %v682
    %v880 = vunpack.c.h.b16 %v682
    %v881 = vunpack.c.l.b16 %v683
    %v882 = vunpack.c.h.b16 %v683
    %v883 = vunpack.c.l.b16 %v684
    %v884 = vunpack.c.h.b16 %v684
    %v885 = vunpack.c.l.b16 %v685
    %v886 = vunpack.c.h.b16 %v685
    %v887 = vunpack.c.l.b16 %v686
    %v888 = vunpack.c.h.b16 %v686
    %v889 = vunpack.c.l.b16 %v687
    %v890 = vunpack.c.h.b16 %v687
    %v891 = vpack.c.b16 %v767, %v763
    %v892 = vpack.c.b16 %v768, %v764
    %v893 = vpack.c.b16 %v769, %v765
    %v894 = vpack.c.b16 %v770, %v766
    %v895 = vpack.c.b16 %v775, %v771
    %v896 = vpack.c.b16 %v776, %v772
    %v897 = vpack.c.b16 %v777, %v773
    %v898 = vpack.c.b16 %v778, %v774
    %v899 = vpack.c.b16 %v783, %v779
    %v900 = vpack.c.b16 %v784, %v780
    %v901 = vpack.c.b16 %v785, %v781
    %v902 = vpack.c.b16 %v786, %v782
    %v903 = vpack.c.b16 %v791, %v787
    %v904 = vpack.c.b16 %v792, %v788
    %v905 = vpack.c.b16 %v793, %v789
    %v906 = vpack.c.b16 %v794, %v790
    %v907 = vpack.c.b16 %v799, %v795
    %v908 = vpack.c.b16 %v800, %v796
    %v909 = vpack.c.b16 %v801, %v797
    %v910 = vpack.c.b16 %v802, %v798
    %v911 = vpack.c.b16 %v807, %v803
    %v912 = vpack.c.b16 %v808, %v804
    %v913 = vpack.c.b16 %v809, %v805
    %v914 = vpack.c.b16 %v810, %v806
    %v915 = vpack.c.b16 %v815, %v811
    %v916 = vpack.c.b16 %v816, %v812
    %v917 = vpack.c.b16 %v817, %v813
    %v918 = vpack.c.b16 %v818, %v814
    %v919 = vpack.c.b16 %v823, %v819
    %v920 = vpack.c.b16 %v824, %v820
    %v921 = vpack.c.b16 %v825, %v821
    %v922 = vpack.c.b16 %v826, %v822
    %v923 = vpack.c.b16 %v831, %v827
    %v924 = vpack.c.b16 %v832, %v828
    %v925 = vpack.c.b16 %v833, %v829
    %v926 = vpack.c.b16 %v834, %v830
    %v927 = vpack.c.b16 %v839, %v835
    %v928 = vpack.c.b16 %v840, %v836
    %v929 = vpack.c.b16 %v841, %v837
    %v930 = vpack.c.b16 %v842, %v838
    %v931 = vpack.c.b16 %v847, %v843
    %v932 = vpack.c.b16 %v848, %v844
    %v933 = vpack.c.b16 %v849, %v845
    %v934 = vpack.c.b16 %v850, %v846
    %v935 = vpack.c.b16 %v855, %v851
    %v936 = vpack.c.b16 %v856, %v852
    %v937 = vpack.c.b16 %v857, %v853
    %v938 = vpack.c.b16 %v858, %v854
    %v939 = vpack.c.b16 %v863, %v859
    %v940 = vpack.c.b16 %v864, %v860
    %v941 = vpack.c.b16 %v865, %v861
    %v942 = vpack.c.b16 %v866, %v862
    %v943 = vpack.c.b16 %v871, %v867
    %v944 = vpack.c.b16 %v872, %v868
    %v945 = vpack.c.b16 %v873, %v869
    %v946 = vpack.c.b16 %v874, %v870
    %v947 = vpack.c.b16 %v879, %v875
    %v948 = vpack.c.b16 %v880, %v876
    %v949 = vpack.c.b16 %v881, %v877
    %v950 = vpack.c.b16 %v882, %v878
    %v951 = vpack.c.b16 %v887, %v883
    %v952 = vpack.c.b16 %v888, %v884
    %v953 = vpack.c.b16 %v889, %v885
    %v954 = vpack.c.b16 %v890, %v886
    %1019 = vmatpush.bf16.msra.mxu0 %v919
    %1020 = vmatpush.bf16.msra.mxu0 %v915
    %1021 = vmatpush.bf16.msra.mxu0 %v911
    %1022 = vmatpush.bf16.msra.mxu0 %v907
    %1023 = vmatpush.bf16.msra.mxu0 %v903
    %1024 = vmatpush.bf16.msra.mxu0 %v899
    %1025 = vmatpush.bf16.msra.mxu0 %v895
    %1026 = vmatpush.bf16.msra.mxu0 %v891
    %1027 = vmatmul.bf16.gmra.mxu0 %v621
    %v1028 = vpop.f32.mrf.mxu0
    %v1029 = vadd.f32 %v691, %v1028
    %v1030 = vpop.f32.mrf.mxu0
    %1031 = vdwg.mxu0
    %1032 = vmatpush.bf16.msra.mxu0 %v951
    %1033 = vmatpush.bf16.msra.mxu0 %v947
    %1034 = vmatpush.bf16.msra.mxu0 %v943
    %1035 = vmatpush.bf16.msra.mxu0 %v939
    %1036 = vmatpush.bf16.msra.mxu0 %v935
    %1037 = vmatpush.bf16.msra.mxu0 %v931
    %1038 = vmatpush.bf16.msra.mxu0 %v927
    %1039 = vmatpush.bf16.msra.mxu0 %v923
    %1040 = vmatmul.bf16.gmra.mxu0 %v622
    %v1041 = vpop.f32.mrf.mxu0
    %v1042 = vadd.f32 %v1029, %v1041
    %v1043 = vpop.f32.mrf.mxu0
    %1044 = vdwg.mxu0
    %1045 = vmatpush.bf16.msra.mxu0 %v920
    %1046 = vmatpush.bf16.msra.mxu0 %v916
    %1047 = vmatpush.bf16.msra.mxu0 %v912
    %1048 = vmatpush.bf16.msra.mxu0 %v908
    %1049 = vmatpush.bf16.msra.mxu0 %v904
    %1050 = vmatpush.bf16.msra.mxu0 %v900
    %1051 = vmatpush.bf16.msra.mxu0 %v896
    %1052 = vmatpush.bf16.msra.mxu0 %v892
    %1053 = vmatmul.bf16.gmra.mxu0 %v621
    %v1054 = vpop.f32.mrf.mxu0
    %v1055 = vadd.f32 %v692, %v1054
    %v1056 = vpop.f32.mrf.mxu0
    %1057 = vdwg.mxu0
    %1058 = vmatpush.bf16.msra.mxu0 %v952
    %1059 = vmatpush.bf16.msra.mxu0 %v948
    %1060 = vmatpush.bf16.msra.mxu0 %v944
    %1061 = vmatpush.bf16.msra.mxu0 %v940
    %1062 = vmatpush.bf16.msra.mxu0 %v936
    %1063 = vmatpush.bf16.msra.mxu0 %v932
    %1064 = vmatpush.bf16.msra.mxu0 %v928
    %1065 = vmatpush.bf16.msra.mxu0 %v924
    %1066 = vmatmul.bf16.gmra.mxu0 %v622
    %v1067 = vpop.f32.mrf.mxu0
    %v1068 = vadd.f32 %v1055, %v1067
    %v1069 = vpop.f32.mrf.mxu0
    %1070 = vdwg.mxu0
    %1071 = vmatpush.bf16.msra.mxu0 %v921
    %1072 = vmatpush.bf16.msra.mxu0 %v917
    %1073 = vmatpush.bf16.msra.mxu0 %v913
    %1074 = vmatpush.bf16.msra.mxu0 %v909
    %1075 = vmatpush.bf16.msra.mxu0 %v905
    %1076 = vmatpush.bf16.msra.mxu0 %v901
    %1077 = vmatpush.bf16.msra.mxu0 %v897
    %1078 = vmatpush.bf16.msra.mxu0 %v893
    %1079 = vmatmul.bf16.gmra.mxu0 %v621
    %v1080 = vpop.f32.mrf.mxu0
    %v1081 = vadd.f32 %v693, %v1080
    %v1082 = vpop.f32.mrf.mxu0
    %1083 = vdwg.mxu0
    %1084 = vmatpush.bf16.msra.mxu0 %v953
    %1085 = vmatpush.bf16.msra.mxu0 %v949
    %1086 = vmatpush.bf16.msra.mxu0 %v945
    %1087 = vmatpush.bf16.msra.mxu0 %v941
    %1088 = vmatpush.bf16.msra.mxu0 %v937
    %1089 = vmatpush.bf16.msra.mxu0 %v933
    %1090 = vmatpush.bf16.msra.mxu0 %v929
    %1091 = vmatpush.bf16.msra.mxu0 %v925
    %1092 = vmatmul.bf16.gmra.mxu0 %v622
    %v1093 = vpop.f32.mrf.mxu0
    %v1094 = vadd.f32 %v1081, %v1093
    %v1095 = vpop.f32.mrf.mxu0
    %1096 = vdwg.mxu0
    %1097 = vmatpush.bf16.msra.mxu0 %v922
    %1098 = vmatpush.bf16.msra.mxu0 %v918
    %1099 = vmatpush.bf16.msra.mxu0 %v914
    %1100 = vmatpush.bf16.msra.mxu0 %v910
    %1101 = vmatpush.bf16.msra.mxu0 %v906
    %1102 = vmatpush.bf16.msra.mxu0 %v902
    %1103 = vmatpush.bf16.msra.mxu0 %v898
    %1104 = vmatpush.bf16.msra.mxu0 %v894
    %1105 = vmatmul.bf16.gmra.mxu0 %v621
    %v1106 = vpop.f32.mrf.mxu0
    %v1107 = vadd.f32 %v694, %v1106
    %v1108 = vpop.f32.mrf.mxu0
    %1109 = vdwg.mxu0
    %1110 = vmatpush.bf16.msra.mxu0 %v954
    %1111 = vmatpush.bf16.msra.mxu0 %v950
    %1112 = vmatpush.bf16.msra.mxu0 %v946
    %1113 = vmatpush.bf16.msra.mxu0 %v942
    %1114 = vmatpush.bf16.msra.mxu0 %v938
    %1115 = vmatpush.bf16.msra.mxu0 %v934
    %1116 = vmatpush.bf16.msra.mxu0 %v930
    %1117 = vmatpush.bf16.msra.mxu0 %v926
    %1118 = vmatmul.bf16.gmra.mxu0 %v622
    %v1119 = vpop.f32.mrf.mxu0
    %v1120 = vadd.f32 %v1107, %v1119
    %v1121 = vpop.f32.mrf.mxu0
    %1122 = vdwg.mxu0
    %v1123 = vxor.u32 %v1042, 2147483648
    %v1124 = vmul.f32 %v1123, 1.442695
    %v1125 = vpow.pop %v1124
    %v1126 = vadd.f32 %v1125, 1.0
    %v1127 = vrcp.pop %v1126
    %v1128 = vmul.f32 %v1126, %v1127
    %v1129 = vsub.f32 1.0, %v1128
    %v1130 = vmul.f32 %v1127, %v1129
    %v1131 = vadd.f32 %v1127, %v1130
    %vm1132 = vweird.f32 %v1126
    %vm1133 = vweird.f32 %v1127
    %vm1134 = vmor %vm1132, %vm1133
    %v1135 = vsel %vm1134, %v1127, %v1131
    %v1136 = vand.u32 2147483647, %v1126
    %vm1137 = vcmp.eq.f32.partialorder %v1136, 8.507059e+37
    %v1138 = vand.u32 %v1126, 2147483648
    %v1139 = vor.u32 1.1754944e-38, %v1138
    %v1140 = vsel %vm1137, %v1139, %v1135
    %v1141 = vmul.f32 1.0, %v1140
    %v1142 = vxor.u32 %v1068, 2147483648
    %v1143 = vmul.f32 %v1142, 1.442695
    %v1144 = vpow.pop %v1143
    %v1145 = vadd.f32 %v1144, 1.0
    %v1146 = vrcp.pop %v1145
    %v1147 = vmul.f32 %v1145, %v1146
    %v1148 = vsub.f32 1.0, %v1147
    %v1149 = vmul.f32 %v1146, %v1148
    %v1150 = vadd.f32 %v1146, %v1149
    %vm1151 = vweird.f32 %v1145
    %vm1152 = vweird.f32 %v1146
    %vm1153 = vmor %vm1151, %vm1152
    %v1154 = vsel %vm1153, %v1146, %v1150
    %v1155 = vand.u32 2147483647, %v1145
    %vm1156 = vcmp.eq.f32.partialorder %v1155, 8.507059e+37
    %v1157 = vand.u32 %v1145, 2147483648
    %v1158 = vor.u32 1.1754944e-38, %v1157
    %v1159 = vsel %vm1156, %v1158, %v1154
    %v1160 = vmul.f32 1.0, %v1159
    %v1161 = vmul.f32 %v1141, %v1120
    %v1162 = vadd.f32 %v1094, %v1161
    %v1163 = vtanh.pop %v1162
    %v1164 = vsub.f32 1.0, %v1160
    %v1165 = vmul.f32 %v1164, %v1163
    %v1166 = vmul.f32 %v1160, %v620
    %v1167 = vadd.f32 %v1165, %v1166
    %v1168 = vld [vmem:[%s1 + $0x4] sm:$0x3]
    %v1169 = vpack.c.bf16 %v1167, %v1167
    %v1170 = vpack.c.bf16 %v1168, %v1168
    %s1171 = scalar_lea.vmem [#allocation2], 1024
    %v1172 = vld [vmem:[%s1171] sm:$0xff]
    %v1173 = vld [vmem:[%s1171 + $0x8] sm:$0xff]
    %v1174 = vld [vmem:[%s1171 + $0x10] sm:$0xff]
    %v1175 = vld [vmem:[%s1171 + $0x18] sm:$0xff]
    %v1176 = vld [vmem:[%s1171 + $0x20] sm:$0xff]
    %v1177 = vld [vmem:[%s1171 + $0x28] sm:$0xff]
    %v1178 = vld [vmem:[%s1171 + $0x30] sm:$0xff]
    %v1179 = vld [vmem:[%s1171 + $0x38] sm:$0xff]
    %v1180 = vld [vmem:[%s1171 + $0x40] sm:$0xff]
    %v1181 = vld [vmem:[%s1171 + $0x48] sm:$0xff]
    %v1182 = vld [vmem:[%s1171 + $0x50] sm:$0xff]
    %v1183 = vld [vmem:[%s1171 + $0x58] sm:$0xff]
    %v1184 = vld [vmem:[%s1171 + $0x60] sm:$0xff]
    %v1185 = vld [vmem:[%s1171 + $0x68] sm:$0xff]
    %v1186 = vld [vmem:[%s1171 + $0x70] sm:$0xff]
    %v1187 = vld [vmem:[%s1171 + $0x78] sm:$0xff]
    %v1188 = vld [vmem:[%s1171 + $0x80] sm:$0xff]
    %v1189 = vld [vmem:[%s1171 + $0x88] sm:$0xff]
    %v1190 = vld [vmem:[%s1171 + $0x90] sm:$0xff]
    %v1191 = vld [vmem:[%s1171 + $0x98] sm:$0xff]
    %v1192 = vld [vmem:[%s1171 + $0xa0] sm:$0xff]
    %v1193 = vld [vmem:[%s1171 + $0xa8] sm:$0xff]
    %v1194 = vld [vmem:[%s1171 + $0xb0] sm:$0xff]
    %v1195 = vld [vmem:[%s1171 + $0xb8] sm:$0xff]
    %v1196 = vld [vmem:[%s1171 + $0xc0] sm:$0xff]
    %v1197 = vld [vmem:[%s1171 + $0xc8] sm:$0xff]
    %v1198 = vld [vmem:[%s1171 + $0xd0] sm:$0xff]
    %v1199 = vld [vmem:[%s1171 + $0xd8] sm:$0xff]
    %v1200 = vld [vmem:[%s1171 + $0xe0] sm:$0xff]
    %v1201 = vld [vmem:[%s1171 + $0xe8] sm:$0xff]
    %v1202 = vld [vmem:[%s1171 + $0xf0] sm:$0xff]
    %v1203 = vld [vmem:[%s1171 + $0xf8] sm:$0xff]
    %v1204 = vld [vmem:[%s1171 + $0x100] sm:$0xff]
    %v1205 = vld [vmem:[%s1171 + $0x108] sm:$0xff]
    %v1206 = vld [vmem:[%s1171 + $0x110] sm:$0xff]
    %v1207 = vld [vmem:[%s1171 + $0x118] sm:$0xff]
    %v1208 = vld [vmem:[%s1171 + $0x120] sm:$0xff]
    %v1209 = vld [vmem:[%s1171 + $0x128] sm:$0xff]
    %v1210 = vld [vmem:[%s1171 + $0x130] sm:$0xff]
    %v1211 = vld [vmem:[%s1171 + $0x138] sm:$0xff]
    %v1212 = vld [vmem:[%s1171 + $0x140] sm:$0xff]
    %v1213 = vld [vmem:[%s1171 + $0x148] sm:$0xff]
    %v1214 = vld [vmem:[%s1171 + $0x150] sm:$0xff]
    %v1215 = vld [vmem:[%s1171 + $0x158] sm:$0xff]
    %v1216 = vld [vmem:[%s1171 + $0x160] sm:$0xff]
    %v1217 = vld [vmem:[%s1171 + $0x168] sm:$0xff]
    %v1218 = vld [vmem:[%s1171 + $0x170] sm:$0xff]
    %v1219 = vld [vmem:[%s1171 + $0x178] sm:$0xff]
    %v1220 = vld [vmem:[%s1171 + $0x180] sm:$0xff]
    %v1221 = vld [vmem:[%s1171 + $0x188] sm:$0xff]
    %v1222 = vld [vmem:[%s1171 + $0x190] sm:$0xff]
    %v1223 = vld [vmem:[%s1171 + $0x198] sm:$0xff]
    %v1224 = vld [vmem:[%s1171 + $0x1a0] sm:$0xff]
    %v1225 = vld [vmem:[%s1171 + $0x1a8] sm:$0xff]
    %v1226 = vld [vmem:[%s1171 + $0x1b0] sm:$0xff]
    %v1227 = vld [vmem:[%s1171 + $0x1b8] sm:$0xff]
    %v1228 = vld [vmem:[%s1171 + $0x1c0] sm:$0xff]
    %v1229 = vld [vmem:[%s1171 + $0x1c8] sm:$0xff]
    %v1230 = vld [vmem:[%s1171 + $0x1d0] sm:$0xff]
    %v1231 = vld [vmem:[%s1171 + $0x1d8] sm:$0xff]
    %v1232 = vld [vmem:[%s1171 + $0x1e0] sm:$0xff]
    %v1233 = vld [vmem:[%s1171 + $0x1e8] sm:$0xff]
    %v1234 = vld [vmem:[%s1171 + $0x1f0] sm:$0xff]
    %v1235 = vld [vmem:[%s1171 + $0x1f8] sm:$0xff]
    %s1236 = scalar_lea.vmem [#allocation5], 8
    %v1237 = vld [vmem:[%s1236] sm:$0xf]
    %v1239 = vperm.slane %v1237, 0
    %v1240 = vperm.slane %v1237, 1
    %v1241 = vperm.slane %v1237, 2
    %v1242 = vperm.slane %v1237, 3
    %v1311 = vunpack.c.l.b16 %v1172
    %v1312 = vunpack.c.h.b16 %v1172
    %v1313 = vunpack.c.l.b16 %v1173
    %v1314 = vunpack.c.h.b16 %v1173
    %v1315 = vunpack.c.l.b16 %v1174
    %v1316 = vunpack.c.h.b16 %v1174
    %v1317 = vunpack.c.l.b16 %v1175
    %v1318 = vunpack.c.h.b16 %v1175
    %v1319 = vunpack.c.l.b16 %v1176
    %v1320 = vunpack.c.h.b16 %v1176
    %v1321 = vunpack.c.l.b16 %v1177
    %v1322 = vunpack.c.h.b16 %v1177
    %v1323 = vunpack.c.l.b16 %v1178
    %v1324 = vunpack.c.h.b16 %v1178
    %v1325 = vunpack.c.l.b16 %v1179
    %v1326 = vunpack.c.h.b16 %v1179
    %v1327 = vunpack.c.l.b16 %v1180
    %v1328 = vunpack.c.h.b16 %v1180
    %v1329 = vunpack.c.l.b16 %v1181
    %v1330 = vunpack.c.h.b16 %v1181
    %v1331 = vunpack.c.l.b16 %v1182
    %v1332 = vunpack.c.h.b16 %v1182
    %v1333 = vunpack.c.l.b16 %v1183
    %v1334 = vunpack.c.h.b16 %v1183
    %v1335 = vunpack.c.l.b16 %v1184
    %v1336 = vunpack.c.h.b16 %v1184
    %v1337 = vunpack.c.l.b16 %v1185
    %v1338 = vunpack.c.h.b16 %v1185
    %v1339 = vunpack.c.l.b16 %v1186
    %v1340 = vunpack.c.h.b16 %v1186
    %v1341 = vunpack.c.l.b16 %v1187
    %v1342 = vunpack.c.h.b16 %v1187
    %v1343 = vunpack.c.l.b16 %v1188
    %v1344 = vunpack.c.h.b16 %v1188
    %v1345 = vunpack.c.l.b16 %v1189
    %v1346 = vunpack.c.h.b16 %v1189
    %v1347 = vunpack.c.l.b16 %v1190
    %v1348 = vunpack.c.h.b16 %v1190
    %v1349 = vunpack.c.l.b16 %v1191
    %v1350 = vunpack.c.h.b16 %v1191
    %v1351 = vunpack.c.l.b16 %v1192
    %v1352 = vunpack.c.h.b16 %v1192
    %v1353 = vunpack.c.l.b16 %v1193
    %v1354 = vunpack.c.h.b16 %v1193
    %v1355 = vunpack.c.l.b16 %v1194
    %v1356 = vunpack.c.h.b16 %v1194
    %v1357 = vunpack.c.l.b16 %v1195
    %v1358 = vunpack.c.h.b16 %v1195
    %v1359 = vunpack.c.l.b16 %v1196
    %v1360 = vunpack.c.h.b16 %v1196
    %v1361 = vunpack.c.l.b16 %v1197
    %v1362 = vunpack.c.h.b16 %v1197
    %v1363 = vunpack.c.l.b16 %v1198
    %v1364 = vunpack.c.h.b16 %v1198
    %v1365 = vunpack.c.l.b16 %v1199
    %v1366 = vunpack.c.h.b16 %v1199
    %v1367 = vunpack.c.l.b16 %v1200
    %v1368 = vunpack.c.h.b16 %v1200
    %v1369 = vunpack.c.l.b16 %v1201
    %v1370 = vunpack.c.h.b16 %v1201
    %v1371 = vunpack.c.l.b16 %v1202
    %v1372 = vunpack.c.h.b16 %v1202
    %v1373 = vunpack.c.l.b16 %v1203
    %v1374 = vunpack.c.h.b16 %v1203
    %v1375 = vunpack.c.l.b16 %v1204
    %v1376 = vunpack.c.h.b16 %v1204
    %v1377 = vunpack.c.l.b16 %v1205
    %v1378 = vunpack.c.h.b16 %v1205
    %v1379 = vunpack.c.l.b16 %v1206
    %v1380 = vunpack.c.h.b16 %v1206
    %v1381 = vunpack.c.l.b16 %v1207
    %v1382 = vunpack.c.h.b16 %v1207
    %v1383 = vunpack.c.l.b16 %v1208
    %v1384 = vunpack.c.h.b16 %v1208
    %v1385 = vunpack.c.l.b16 %v1209
    %v1386 = vunpack.c.h.b16 %v1209
    %v1387 = vunpack.c.l.b16 %v1210
    %v1388 = vunpack.c.h.b16 %v1210
    %v1389 = vunpack.c.l.b16 %v1211
    %v1390 = vunpack.c.h.b16 %v1211
    %v1391 = vunpack.c.l.b16 %v1212
    %v1392 = vunpack.c.h.b16 %v1212
    %v1393 = vunpack.c.l.b16 %v1213
    %v1394 = vunpack.c.h.b16 %v1213
    %v1395 = vunpack.c.l.b16 %v1214
    %v1396 = vunpack.c.h.b16 %v1214
    %v1397 = vunpack.c.l.b16 %v1215
    %v1398 = vunpack.c.h.b16 %v1215
    %v1399 = vunpack.c.l.b16 %v1216
    %v1400 = vunpack.c.h.b16 %v1216
    %v1401 = vunpack.c.l.b16 %v1217
    %v1402 = vunpack.c.h.b16 %v1217
    %v1403 = vunpack.c.l.b16 %v1218
    %v1404 = vunpack.c.h.b16 %v1218
    %v1405 = vunpack.c.l.b16 %v1219
    %v1406 = vunpack.c.h.b16 %v1219
    %v1407 = vunpack.c.l.b16 %v1220
    %v1408 = vunpack.c.h.b16 %v1220
    %v1409 = vunpack.c.l.b16 %v1221
    %v1410 = vunpack.c.h.b16 %v1221
    %v1411 = vunpack.c.l.b16 %v1222
    %v1412 = vunpack.c.h.b16 %v1222
    %v1413 = vunpack.c.l.b16 %v1223
    %v1414 = vunpack.c.h.b16 %v1223
    %v1415 = vunpack.c.l.b16 %v1224
    %v1416 = vunpack.c.h.b16 %v1224
    %v1417 = vunpack.c.l.b16 %v1225
    %v1418 = vunpack.c.h.b16 %v1225
    %v1419 = vunpack.c.l.b16 %v1226
    %v1420 = vunpack.c.h.b16 %v1226
    %v1421 = vunpack.c.l.b16 %v1227
    %v1422 = vunpack.c.h.b16 %v1227
    %v1423 = vunpack.c.l.b16 %v1228
    %v1424 = vunpack.c.h.b16 %v1228
    %v1425 = vunpack.c.l.b16 %v1229
    %v1426 = vunpack.c.h.b16 %v1229
    %v1427 = vunpack.c.l.b16 %v1230
    %v1428 = vunpack.c.h.b16 %v1230
    %v1429 = vunpack.c.l.b16 %v1231
    %v1430 = vunpack.c.h.b16 %v1231
    %v1431 = vunpack.c.l.b16 %v1232
    %v1432 = vunpack.c.h.b16 %v1232
    %v1433 = vunpack.c.l.b16 %v1233
    %v1434 = vunpack.c.h.b16 %v1233
    %v1435 = vunpack.c.l.b16 %v1234
    %v1436 = vunpack.c.h.b16 %v1234
    %v1437 = vunpack.c.l.b16 %v1235
    %v1438 = vunpack.c.h.b16 %v1235
    %v1439 = vpack.c.b16 %v1315, %v1311
    %v1440 = vpack.c.b16 %v1316, %v1312
    %v1441 = vpack.c.b16 %v1317, %v1313
    %v1442 = vpack.c.b16 %v1318, %v1314
    %v1443 = vpack.c.b16 %v1323, %v1319
    %v1444 = vpack.c.b16 %v1324, %v1320
    %v1445 = vpack.c.b16 %v1325, %v1321
    %v1446 = vpack.c.b16 %v1326, %v1322
    %v1447 = vpack.c.b16 %v1331, %v1327
    %v1448 = vpack.c.b16 %v1332, %v1328
    %v1449 = vpack.c.b16 %v1333, %v1329
    %v1450 = vpack.c.b16 %v1334, %v1330
    %v1451 = vpack.c.b16 %v1339, %v1335
    %v1452 = vpack.c.b16 %v1340, %v1336
    %v1453 = vpack.c.b16 %v1341, %v1337
    %v1454 = vpack.c.b16 %v1342, %v1338
    %v1455 = vpack.c.b16 %v1347, %v1343
    %v1456 = vpack.c.b16 %v1348, %v1344
    %v1457 = vpack.c.b16 %v1349, %v1345
    %v1458 = vpack.c.b16 %v1350, %v1346
    %v1459 = vpack.c.b16 %v1355, %v1351
    %v1460 = vpack.c.b16 %v1356, %v1352
    %v1461 = vpack.c.b16 %v1357, %v1353
    %v1462 = vpack.c.b16 %v1358, %v1354
    %v1463 = vpack.c.b16 %v1363, %v1359
    %v1464 = vpack.c.b16 %v1364, %v1360
    %v1465 = vpack.c.b16 %v1365, %v1361
    %v1466 = vpack.c.b16 %v1366, %v1362
    %v1467 = vpack.c.b16 %v1371, %v1367
    %v1468 = vpack.c.b16 %v1372, %v1368
    %v1469 = vpack.c.b16 %v1373, %v1369
    %v1470 = vpack.c.b16 %v1374, %v1370
    %v1471 = vpack.c.b16 %v1379, %v1375
    %v1472 = vpack.c.b16 %v1380, %v1376
    %v1473 = vpack.c.b16 %v1381, %v1377
    %v1474 = vpack.c.b16 %v1382, %v1378
    %v1475 = vpack.c.b16 %v1387, %v1383
    %v1476 = vpack.c.b16 %v1388, %v1384
    %v1477 = vpack.c.b16 %v1389, %v1385
    %v1478 = vpack.c.b16 %v1390, %v1386
    %v1479 = vpack.c.b16 %v1395, %v1391
    %v1480 = vpack.c.b16 %v1396, %v1392
    %v1481 = vpack.c.b16 %v1397, %v1393
    %v1482 = vpack.c.b16 %v1398, %v1394
    %v1483 = vpack.c.b16 %v1403, %v1399
    %v1484 = vpack.c.b16 %v1404, %v1400
    %v1485 = vpack.c.b16 %v1405, %v1401
    %v1486 = vpack.c.b16 %v1406, %v1402
    %v1487 = vpack.c.b16 %v1411, %v1407
    %v1488 = vpack.c.b16 %v1412, %v1408
    %v1489 = vpack.c.b16 %v1413, %v1409
    %v1490 = vpack.c.b16 %v1414, %v1410
    %v1491 = vpack.c.b16 %v1419, %v1415
    %v1492 = vpack.c.b16 %v1420, %v1416
    %v1493 = vpack.c.b16 %v1421, %v1417
    %v1494 = vpack.c.b16 %v1422, %v1418
    %v1495 = vpack.c.b16 %v1427, %v1423
    %v1496 = vpack.c.b16 %v1428, %v1424
    %v1497 = vpack.c.b16 %v1429, %v1425
    %v1498 = vpack.c.b16 %v1430, %v1426
    %v1499 = vpack.c.b16 %v1435, %v1431
    %v1500 = vpack.c.b16 %v1436, %v1432
    %v1501 = vpack.c.b16 %v1437, %v1433
    %v1502 = vpack.c.b16 %v1438, %v1434
    %1567 = vmatpush.bf16.msra.mxu0 %v1467
    %1568 = vmatpush.bf16.msra.mxu0 %v1463
    %1569 = vmatpush.bf16.msra.mxu0 %v1459
    %1570 = vmatpush.bf16.msra.mxu0 %v1455
    %1571 = vmatpush.bf16.msra.mxu0 %v1451
    %1572 = vmatpush.bf16.msra.mxu0 %v1447
    %1573 = vmatpush.bf16.msra.mxu0 %v1443
    %1574 = vmatpush.bf16.msra.mxu0 %v1439
    %1575 = vmatmul.bf16.gmra.mxu0 %v1169
    %v1576 = vpop.f32.mrf.mxu0
    %v1577 = vadd.f32 %v1239, %v1576
    %v1578 = vpop.f32.mrf.mxu0
    %1579 = vdwg.mxu0
    %1580 = vmatpush.bf16.msra.mxu0 %v1499
    %1581 = vmatpush.bf16.msra.mxu0 %v1495
    %1582 = vmatpush.bf16.msra.mxu0 %v1491
    %1583 = vmatpush.bf16.msra.mxu0 %v1487
    %1584 = vmatpush.bf16.msra.mxu0 %v1483
    %1585 = vmatpush.bf16.msra.mxu0 %v1479
    %1586 = vmatpush.bf16.msra.mxu0 %v1475
    %1587 = vmatpush.bf16.msra.mxu0 %v1471
    %1588 = vmatmul.bf16.gmra.mxu0 %v1170
    %v1589 = vpop.f32.mrf.mxu0
    %v1590 = vadd.f32 %v1577, %v1589
    %v1591 = vpop.f32.mrf.mxu0
    %1592 = vdwg.mxu0
    %1593 = vmatpush.bf16.msra.mxu0 %v1468
    %1594 = vmatpush.bf16.msra.mxu0 %v1464
    %1595 = vmatpush.bf16.msra.mxu0 %v1460
    %1596 = vmatpush.bf16.msra.mxu0 %v1456
    %1597 = vmatpush.bf16.msra.mxu0 %v1452
    %1598 = vmatpush.bf16.msra.mxu0 %v1448
    %1599 = vmatpush.bf16.msra.mxu0 %v1444
    %1600 = vmatpush.bf16.msra.mxu0 %v1440
    %1601 = vmatmul.bf16.gmra.mxu0 %v1169
    %v1602 = vpop.f32.mrf.mxu0
    %v1603 = vadd.f32 %v1240, %v1602
    %v1604 = vpop.f32.mrf.mxu0
    %1605 = vdwg.mxu0
    %1606 = vmatpush.bf16.msra.mxu0 %v1500
    %1607 = vmatpush.bf16.msra.mxu0 %v1496
    %1608 = vmatpush.bf16.msra.mxu0 %v1492
    %1609 = vmatpush.bf16.msra.mxu0 %v1488
    %1610 = vmatpush.bf16.msra.mxu0 %v1484
    %1611 = vmatpush.bf16.msra.mxu0 %v1480
    %1612 = vmatpush.bf16.msra.mxu0 %v1476
    %1613 = vmatpush.bf16.msra.mxu0 %v1472
    %1614 = vmatmul.bf16.gmra.mxu0 %v1170
    %v1615 = vpop.f32.mrf.mxu0
    %v1616 = vadd.f32 %v1603, %v1615
    %v1617 = vpop.f32.mrf.mxu0
    %1618 = vdwg.mxu0
    %1619 = vmatpush.bf16.msra.mxu0 %v1469
    %1620 = vmatpush.bf16.msra.mxu0 %v1465
    %1621 = vmatpush.bf16.msra.mxu0 %v1461
    %1622 = vmatpush.bf16.msra.mxu0 %v1457
    %1623 = vmatpush.bf16.msra.mxu0 %v1453
    %1624 = vmatpush.bf16.msra.mxu0 %v1449
    %1625 = vmatpush.bf16.msra.mxu0 %v1445
    %1626 = vmatpush.bf16.msra.mxu0 %v1441
    %1627 = vmatmul.bf16.gmra.mxu0 %v1169
    %v1628 = vpop.f32.mrf.mxu0
    %v1629 = vadd.f32 %v1241, %v1628
    %v1630 = vpop.f32.mrf.mxu0
    %1631 = vdwg.mxu0
    %1632 = vmatpush.bf16.msra.mxu0 %v1501
    %1633 = vmatpush.bf16.msra.mxu0 %v1497
    %1634 = vmatpush.bf16.msra.mxu0 %v1493
    %1635 = vmatpush.bf16.msra.mxu0 %v1489
    %1636 = vmatpush.bf16.msra.mxu0 %v1485
    %1637 = vmatpush.bf16.msra.mxu0 %v1481
    %1638 = vmatpush.bf16.msra.mxu0 %v1477
    %1639 = vmatpush.bf16.msra.mxu0 %v1473
    %1640 = vmatmul.bf16.gmra.mxu0 %v1170
    %v1641 = vpop.f32.mrf.mxu0
    %v1642 = vadd.f32 %v1629, %v1641
    %v1643 = vpop.f32.mrf.mxu0
    %1644 = vdwg.mxu0
    %1645 = vmatpush.bf16.msra.mxu0 %v1470
    %1646 = vmatpush.bf16.msra.mxu0 %v1466
    %1647 = vmatpush.bf16.msra.mxu0 %v1462
    %1648 = vmatpush.bf16.msra.mxu0 %v1458
    %1649 = vmatpush.bf16.msra.mxu0 %v1454
    %1650 = vmatpush.bf16.msra.mxu0 %v1450
    %1651 = vmatpush.bf16.msra.mxu0 %v1446
    %1652 = vmatpush.bf16.msra.mxu0 %v1442
    %1653 = vmatmul.bf16.gmra.mxu0 %v1169
    %v1654 = vpop.f32.mrf.mxu0
    %v1655 = vadd.f32 %v1242, %v1654
    %v1656 = vpop.f32.mrf.mxu0
    %1657 = vdwg.mxu0
    %1658 = vmatpush.bf16.msra.mxu0 %v1502
    %1659 = vmatpush.bf16.msra.mxu0 %v1498
    %1660 = vmatpush.bf16.msra.mxu0 %v1494
    %1661 = vmatpush.bf16.msra.mxu0 %v1490
    %1662 = vmatpush.bf16.msra.mxu0 %v1486
    %1663 = vmatpush.bf16.msra.mxu0 %v1482
    %1664 = vmatpush.bf16.msra.mxu0 %v1478
    %1665 = vmatpush.bf16.msra.mxu0 %v1474
    %1666 = vmatmul.bf16.gmra.mxu0 %v1170
    %v1667 = vpop.f32.mrf.mxu0
    %v1668 = vadd.f32 %v1655, %v1667
    %v1669 = vpop.f32.mrf.mxu0
    %1670 = vdwg.mxu0
    %v1671 = vxor.u32 %v1590, 2147483648
    %v1672 = vmul.f32 %v1671, 1.442695
    %v1673 = vpow.pop %v1672
    %v1674 = vadd.f32 %v1673, 1.0
    %v1675 = vrcp.pop %v1674
    %v1676 = vmul.f32 %v1674, %v1675
    %v1677 = vsub.f32 1.0, %v1676
    %v1678 = vmul.f32 %v1675, %v1677
    %v1679 = vadd.f32 %v1675, %v1678
    %vm1680 = vweird.f32 %v1674
    %vm1681 = vweird.f32 %v1675
    %vm1682 = vmor %vm1680, %vm1681
    %v1683 = vsel %vm1682, %v1675, %v1679
    %v1684 = vand.u32 2147483647, %v1674
    %vm1685 = vcmp.eq.f32.partialorder %v1684, 8.507059e+37
    %v1686 = vand.u32 %v1674, 2147483648
    %v1687 = vor.u32 1.1754944e-38, %v1686
    %v1688 = vsel %vm1685, %v1687, %v1683
    %v1689 = vmul.f32 1.0, %v1688
    %v1690 = vxor.u32 %v1616, 2147483648
    %v1691 = vmul.f32 %v1690, 1.442695
    %v1692 = vpow.pop %v1691
    %v1693 = vadd.f32 %v1692, 1.0
    %v1694 = vrcp.pop %v1693
    %v1695 = vmul.f32 %v1693, %v1694
    %v1696 = vsub.f32 1.0, %v1695
    %v1697 = vmul.f32 %v1694, %v1696
    %v1698 = vadd.f32 %v1694, %v1697
    %vm1699 = vweird.f32 %v1693
    %vm1700 = vweird.f32 %v1694
    %vm1701 = vmor %vm1699, %vm1700
    %v1702 = vsel %vm1701, %v1694, %v1698
    %v1703 = vand.u32 2147483647, %v1693
    %vm1704 = vcmp.eq.f32.partialorder %v1703, 8.507059e+37
    %v1705 = vand.u32 %v1693, 2147483648
    %v1706 = vor.u32 1.1754944e-38, %v1705
    %v1707 = vsel %vm1704, %v1706, %v1702
    %v1708 = vmul.f32 1.0, %v1707
    %v1709 = vmul.f32 %v1689, %v1668
    %v1710 = vadd.f32 %v1642, %v1709
    %v1711 = vtanh.pop %v1710
    %v1712 = vsub.f32 1.0, %v1708
    %v1713 = vmul.f32 %v1712, %v1711
    %v1714 = vmul.f32 %v1708, %v1168
    %v1715 = vadd.f32 %v1713, %v1714
    %v1716 = vld [vmem:[%s1 + $0x6] sm:$0x3]
    %v1717 = vpack.c.bf16 %v1715, %v1715
    %v1718 = vpack.c.bf16 %v1716, %v1716
    %s1719 = scalar_lea.vmem [#allocation2], 1536
    %v1720 = vld [vmem:[%s1719] sm:$0xff]
    %v1721 = vld [vmem:[%s1719 + $0x8] sm:$0xff]
    %v1722 = vld [vmem:[%s1719 + $0x10] sm:$0xff]
    %v1723 = vld [vmem:[%s1719 + $0x18] sm:$0xff]
    %v1724 = vld [vmem:[%s1719 + $0x20] sm:$0xff]
    %v1725 = vld [vmem:[%s1719 + $0x28] sm:$0xff]
    %v1726 = vld [vmem:[%s1719 + $0x30] sm:$0xff]
    %v1727 = vld [vmem:[%s1719 + $0x38] sm:$0xff]
    %v1728 = vld [vmem:[%s1719 + $0x40] sm:$0xff]
    %v1729 = vld [vmem:[%s1719 + $0x48] sm:$0xff]
    %v1730 = vld [vmem:[%s1719 + $0x50] sm:$0xff]
    %v1731 = vld [vmem:[%s1719 + $0x58] sm:$0xff]
    %v1732 = vld [vmem:[%s1719 + $0x60] sm:$0xff]
    %v1733 = vld [vmem:[%s1719 + $0x68] sm:$0xff]
    %v1734 = vld [vmem:[%s1719 + $0x70] sm:$0xff]
    %v1735 = vld [vmem:[%s1719 + $0x78] sm:$0xff]
    %v1736 = vld [vmem:[%s1719 + $0x80] sm:$0xff]
    %v1737 = vld [vmem:[%s1719 + $0x88] sm:$0xff]
    %v1738 = vld [vmem:[%s1719 + $0x90] sm:$0xff]
    %v1739 = vld [vmem:[%s1719 + $0x98] sm:$0xff]
    %v1740 = vld [vmem:[%s1719 + $0xa0] sm:$0xff]
    %v1741 = vld [vmem:[%s1719 + $0xa8] sm:$0xff]
    %v1742 = vld [vmem:[%s1719 + $0xb0] sm:$0xff]
    %v1743 = vld [vmem:[%s1719 + $0xb8] sm:$0xff]
    %v1744 = vld [vmem:[%s1719 + $0xc0] sm:$0xff]
    %v1745 = vld [vmem:[%s1719 + $0xc8] sm:$0xff]
    %v1746 = vld [vmem:[%s1719 + $0xd0] sm:$0xff]
    %v1747 = vld [vmem:[%s1719 + $0xd8] sm:$0xff]
    %v1748 = vld [vmem:[%s1719 + $0xe0] sm:$0xff]
    %v1749 = vld [vmem:[%s1719 + $0xe8] sm:$0xff]
    %v1750 = vld [vmem:[%s1719 + $0xf0] sm:$0xff]
    %v1751 = vld [vmem:[%s1719 + $0xf8] sm:$0xff]
    %v1752 = vld [vmem:[%s1719 + $0x100] sm:$0xff]
    %v1753 = vld [vmem:[%s1719 + $0x108] sm:$0xff]
    %v1754 = vld [vmem:[%s1719 + $0x110] sm:$0xff]
    %v1755 = vld [vmem:[%s1719 + $0x118] sm:$0xff]
    %v1756 = vld [vmem:[%s1719 + $0x120] sm:$0xff]
    %v1757 = vld [vmem:[%s1719 + $0x128] sm:$0xff]
    %v1758 = vld [vmem:[%s1719 + $0x130] sm:$0xff]
    %v1759 = vld [vmem:[%s1719 + $0x138] sm:$0xff]
    %v1760 = vld [vmem:[%s1719 + $0x140] sm:$0xff]
    %v1761 = vld [vmem:[%s1719 + $0x148] sm:$0xff]
    %v1762 = vld [vmem:[%s1719 + $0x150] sm:$0xff]
    %v1763 = vld [vmem:[%s1719 + $0x158] sm:$0xff]
    %v1764 = vld [vmem:[%s1719 + $0x160] sm:$0xff]
    %v1765 = vld [vmem:[%s1719 + $0x168] sm:$0xff]
    %v1766 = vld [vmem:[%s1719 + $0x170] sm:$0xff]
    %v1767 = vld [vmem:[%s1719 + $0x178] sm:$0xff]
    %v1768 = vld [vmem:[%s1719 + $0x180] sm:$0xff]
    %v1769 = vld [vmem:[%s1719 + $0x188] sm:$0xff]
    %v1770 = vld [vmem:[%s1719 + $0x190] sm:$0xff]
    %v1771 = vld [vmem:[%s1719 + $0x198] sm:$0xff]
    %v1772 = vld [vmem:[%s1719 + $0x1a0] sm:$0xff]
    %v1773 = vld [vmem:[%s1719 + $0x1a8] sm:$0xff]
    %v1774 = vld [vmem:[%s1719 + $0x1b0] sm:$0xff]
    %v1775 = vld [vmem:[%s1719 + $0x1b8] sm:$0xff]
    %v1776 = vld [vmem:[%s1719 + $0x1c0] sm:$0xff]
    %v1777 = vld [vmem:[%s1719 + $0x1c8] sm:$0xff]
    %v1778 = vld [vmem:[%s1719 + $0x1d0] sm:$0xff]
    %v1779 = vld [vmem:[%s1719 + $0x1d8] sm:$0xff]
    %v1780 = vld [vmem:[%s1719 + $0x1e0] sm:$0xff]
    %v1781 = vld [vmem:[%s1719 + $0x1e8] sm:$0xff]
    %v1782 = vld [vmem:[%s1719 + $0x1f0] sm:$0xff]
    %v1783 = vld [vmem:[%s1719 + $0x1f8] sm:$0xff]
    %s1784 = scalar_lea.vmem [#allocation5], 12
    %v1785 = vld [vmem:[%s1784] sm:$0xf]
    %v1787 = vperm.slane %v1785, 0
    %v1788 = vperm.slane %v1785, 1
    %v1789 = vperm.slane %v1785, 2
    %v1790 = vperm.slane %v1785, 3
    %v1859 = vunpack.c.l.b16 %v1720
    %v1860 = vunpack.c.h.b16 %v1720
    %v1861 = vunpack.c.l.b16 %v1721
    %v1862 = vunpack.c.h.b16 %v1721
    %v1863 = vunpack.c.l.b16 %v1722
    %v1864 = vunpack.c.h.b16 %v1722
    %v1865 = vunpack.c.l.b16 %v1723
    %v1866 = vunpack.c.h.b16 %v1723
    %v1867 = vunpack.c.l.b16 %v1724
    %v1868 = vunpack.c.h.b16 %v1724
    %v1869 = vunpack.c.l.b16 %v1725
    %v1870 = vunpack.c.h.b16 %v1725
    %v1871 = vunpack.c.l.b16 %v1726
    %v1872 = vunpack.c.h.b16 %v1726
    %v1873 = vunpack.c.l.b16 %v1727
    %v1874 = vunpack.c.h.b16 %v1727
    %v1875 = vunpack.c.l.b16 %v1728
    %v1876 = vunpack.c.h.b16 %v1728
    %v1877 = vunpack.c.l.b16 %v1729
    %v1878 = vunpack.c.h.b16 %v1729
    %v1879 = vunpack.c.l.b16 %v1730
    %v1880 = vunpack.c.h.b16 %v1730
    %v1881 = vunpack.c.l.b16 %v1731
    %v1882 = vunpack.c.h.b16 %v1731
    %v1883 = vunpack.c.l.b16 %v1732
    %v1884 = vunpack.c.h.b16 %v1732
    %v1885 = vunpack.c.l.b16 %v1733
    %v1886 = vunpack.c.h.b16 %v1733
    %v1887 = vunpack.c.l.b16 %v1734
    %v1888 = vunpack.c.h.b16 %v1734
    %v1889 = vunpack.c.l.b16 %v1735
    %v1890 = vunpack.c.h.b16 %v1735
    %v1891 = vunpack.c.l.b16 %v1736
    %v1892 = vunpack.c.h.b16 %v1736
    %v1893 = vunpack.c.l.b16 %v1737
    %v1894 = vunpack.c.h.b16 %v1737
    %v1895 = vunpack.c.l.b16 %v1738
    %v1896 = vunpack.c.h.b16 %v1738
    %v1897 = vunpack.c.l.b16 %v1739
    %v1898 = vunpack.c.h.b16 %v1739
    %v1899 = vunpack.c.l.b16 %v1740
    %v1900 = vunpack.c.h.b16 %v1740
    %v1901 = vunpack.c.l.b16 %v1741
    %v1902 = vunpack.c.h.b16 %v1741
    %v1903 = vunpack.c.l.b16 %v1742
    %v1904 = vunpack.c.h.b16 %v1742
    %v1905 = vunpack.c.l.b16 %v1743
    %v1906 = vunpack.c.h.b16 %v1743
    %v1907 = vunpack.c.l.b16 %v1744
    %v1908 = vunpack.c.h.b16 %v1744
    %v1909 = vunpack.c.l.b16 %v1745
    %v1910 = vunpack.c.h.b16 %v1745
    %v1911 = vunpack.c.l.b16 %v1746
    %v1912 = vunpack.c.h.b16 %v1746
    %v1913 = vunpack.c.l.b16 %v1747
    %v1914 = vunpack.c.h.b16 %v1747
    %v1915 = vunpack.c.l.b16 %v1748
    %v1916 = vunpack.c.h.b16 %v1748
    %v1917 = vunpack.c.l.b16 %v1749
    %v1918 = vunpack.c.h.b16 %v1749
    %v1919 = vunpack.c.l.b16 %v1750
    %v1920 = vunpack.c.h.b16 %v1750
    %v1921 = vunpack.c.l.b16 %v1751
    %v1922 = vunpack.c.h.b16 %v1751
    %v1923 = vunpack.c.l.b16 %v1752
    %v1924 = vunpack.c.h.b16 %v1752
    %v1925 = vunpack.c.l.b16 %v1753
    %v1926 = vunpack.c.h.b16 %v1753
    %v1927 = vunpack.c.l.b16 %v1754
    %v1928 = vunpack.c.h.b16 %v1754
    %v1929 = vunpack.c.l.b16 %v1755
    %v1930 = vunpack.c.h.b16 %v1755
    %v1931 = vunpack.c.l.b16 %v1756
    %v1932 = vunpack.c.h.b16 %v1756
    %v1933 = vunpack.c.l.b16 %v1757
    %v1934 = vunpack.c.h.b16 %v1757
    %v1935 = vunpack.c.l.b16 %v1758
    %v1936 = vunpack.c.h.b16 %v1758
    %v1937 = vunpack.c.l.b16 %v1759
    %v1938 = vunpack.c.h.b16 %v1759
    %v1939 = vunpack.c.l.b16 %v1760
    %v1940 = vunpack.c.h.b16 %v1760
    %v1941 = vunpack.c.l.b16 %v1761
    %v1942 = vunpack.c.h.b16 %v1761
    %v1943 = vunpack.c.l.b16 %v1762
    %v1944 = vunpack.c.h.b16 %v1762
    %v1945 = vunpack.c.l.b16 %v1763
    %v1946 = vunpack.c.h.b16 %v1763
    %v1947 = vunpack.c.l.b16 %v1764
    %v1948 = vunpack.c.h.b16 %v1764
    %v1949 = vunpack.c.l.b16 %v1765
    %v1950 = vunpack.c.h.b16 %v1765
    %v1951 = vunpack.c.l.b16 %v1766
    %v1952 = vunpack.c.h.b16 %v1766
    %v1953 = vunpack.c.l.b16 %v1767
    %v1954 = vunpack.c.h.b16 %v1767
    %v1955 = vunpack.c.l.b16 %v1768
    %v1956 = vunpack.c.h.b16 %v1768
    %v1957 = vunpack.c.l.b16 %v1769
    %v1958 = vunpack.c.h.b16 %v1769
    %v1959 = vunpack.c.l.b16 %v1770
    %v1960 = vunpack.c.h.b16 %v1770
    %v1961 = vunpack.c.l.b16 %v1771
    %v1962 = vunpack.c.h.b16 %v1771
    %v1963 = vunpack.c.l.b16 %v1772
    %v1964 = vunpack.c.h.b16 %v1772
    %v1965 = vunpack.c.l.b16 %v1773
    %v1966 = vunpack.c.h.b16 %v1773
    %v1967 = vunpack.c.l.b16 %v1774
    %v1968 = vunpack.c.h.b16 %v1774
    %v1969 = vunpack.c.l.b16 %v1775
    %v1970 = vunpack.c.h.b16 %v1775
    %v1971 = vunpack.c.l.b16 %v1776
    %v1972 = vunpack.c.h.b16 %v1776
    %v1973 = vunpack.c.l.b16 %v1777
    %v1974 = vunpack.c.h.b16 %v1777
    %v1975 = vunpack.c.l.b16 %v1778
    %v1976 = vunpack.c.h.b16 %v1778
    %v1977 = vunpack.c.l.b16 %v1779
    %v1978 = vunpack.c.h.b16 %v1779
    %v1979 = vunpack.c.l.b16 %v1780
    %v1980 = vunpack.c.h.b16 %v1780
    %v1981 = vunpack.c.l.b16 %v1781
    %v1982 = vunpack.c.h.b16 %v1781
    %v1983 = vunpack.c.l.b16 %v1782
    %v1984 = vunpack.c.h.b16 %v1782
    %v1985 = vunpack.c.l.b16 %v1783
    %v1986 = vunpack.c.h.b16 %v1783
    %v1987 = vpack.c.b16 %v1863, %v1859
    %v1988 = vpack.c.b16 %v1864, %v1860
    %v1989 = vpack.c.b16 %v1865, %v1861
    %v1990 = vpack.c.b16 %v1866, %v1862
    %v1991 = vpack.c.b16 %v1871, %v1867
    %v1992 = vpack.c.b16 %v1872, %v1868
    %v1993 = vpack.c.b16 %v1873, %v1869
    %v1994 = vpack.c.b16 %v1874, %v1870
    %v1995 = vpack.c.b16 %v1879, %v1875
    %v1996 = vpack.c.b16 %v1880, %v1876
    %v1997 = vpack.c.b16 %v1881, %v1877
    %v1998 = vpack.c.b16 %v1882, %v1878
    %v1999 = vpack.c.b16 %v1887, %v1883
    %v2000 = vpack.c.b16 %v1888, %v1884
    %v2001 = vpack.c.b16 %v1889, %v1885
    %v2002 = vpack.c.b16 %v1890, %v1886
    %v2003 = vpack.c.b16 %v1895, %v1891
    %v2004 = vpack.c.b16 %v1896, %v1892
    %v2005 = vpack.c.b16 %v1897, %v1893
    %v2006 = vpack.c.b16 %v1898, %v1894
    %v2007 = vpack.c.b16 %v1903, %v1899
    %v2008 = vpack.c.b16 %v1904, %v1900
    %v2009 = vpack.c.b16 %v1905, %v1901
    %v2010 = vpack.c.b16 %v1906, %v1902
    %v2011 = vpack.c.b16 %v1911, %v1907
    %v2012 = vpack.c.b16 %v1912, %v1908
    %v2013 = vpack.c.b16 %v1913, %v1909
    %v2014 = vpack.c.b16 %v1914, %v1910
    %v2015 = vpack.c.b16 %v1919, %v1915
    %v2016 = vpack.c.b16 %v1920, %v1916
    %v2017 = vpack.c.b16 %v1921, %v1917
    %v2018 = vpack.c.b16 %v1922, %v1918
    %v2019 = vpack.c.b16 %v1927, %v1923
    %v2020 = vpack.c.b16 %v1928, %v1924
    %v2021 = vpack.c.b16 %v1929, %v1925
    %v2022 = vpack.c.b16 %v1930, %v1926
    %v2023 = vpack.c.b16 %v1935, %v1931
    %v2024 = vpack.c.b16 %v1936, %v1932
    %v2025 = vpack.c.b16 %v1937, %v1933
    %v2026 = vpack.c.b16 %v1938, %v1934
    %v2027 = vpack.c.b16 %v1943, %v1939
    %v2028 = vpack.c.b16 %v1944, %v1940
    %v2029 = vpack.c.b16 %v1945, %v1941
    %v2030 = vpack.c.b16 %v1946, %v1942
    %v2031 = vpack.c.b16 %v1951, %v1947
    %v2032 = vpack.c.b16 %v1952, %v1948
    %v2033 = vpack.c.b16 %v1953, %v1949
    %v2034 = vpack.c.b16 %v1954, %v1950
    %v2035 = vpack.c.b16 %v1959, %v1955
    %v2036 = vpack.c.b16 %v1960, %v1956
    %v2037 = vpack.c.b16 %v1961, %v1957
    %v2038 = vpack.c.b16 %v1962, %v1958
    %v2039 = vpack.c.b16 %v1967, %v1963
    %v2040 = vpack.c.b16 %v1968, %v1964
    %v2041 = vpack.c.b16 %v1969, %v1965
    %v2042 = vpack.c.b16 %v1970, %v1966
    %v2043 = vpack.c.b16 %v1975, %v1971
    %v2044 = vpack.c.b16 %v1976, %v1972
    %v2045 = vpack.c.b16 %v1977, %v1973
    %v2046 = vpack.c.b16 %v1978, %v1974
    %v2047 = vpack.c.b16 %v1983, %v1979
    %v2048 = vpack.c.b16 %v1984, %v1980
    %v2049 = vpack.c.b16 %v1985, %v1981
    %v2050 = vpack.c.b16 %v1986, %v1982
    %2115 = vmatpush.bf16.msra.mxu0 %v2015
    %2116 = vmatpush.bf16.msra.mxu0 %v2011
    %2117 = vmatpush.bf16.msra.mxu0 %v2007
    %2118 = vmatpush.bf16.msra.mxu0 %v2003
    %2119 = vmatpush.bf16.msra.mxu0 %v1999
    %2120 = vmatpush.bf16.msra.mxu0 %v1995
    %2121 = vmatpush.bf16.msra.mxu0 %v1991
    %2122 = vmatpush.bf16.msra.mxu0 %v1987
    %2123 = vmatmul.bf16.gmra.mxu0 %v1717
    %v2124 = vpop.f32.mrf.mxu0
    %v2125 = vadd.f32 %v1787, %v2124
    %v2126 = vpop.f32.mrf.mxu0
    %2127 = vdwg.mxu0
    %2128 = vmatpush.bf16.msra.mxu0 %v2047
    %2129 = vmatpush.bf16.msra.mxu0 %v2043
    %2130 = vmatpush.bf16.msra.mxu0 %v2039
    %2131 = vmatpush.bf16.msra.mxu0 %v2035
    %2132 = vmatpush.bf16.msra.mxu0 %v2031
    %2133 = vmatpush.bf16.msra.mxu0 %v2027
    %2134 = vmatpush.bf16.msra.mxu0 %v2023
    %2135 = vmatpush.bf16.msra.mxu0 %v2019
    %2136 = vmatmul.bf16.gmra.mxu0 %v1718
    %v2137 = vpop.f32.mrf.mxu0
    %v2138 = vadd.f32 %v2125, %v2137
    %v2139 = vpop.f32.mrf.mxu0
    %2140 = vdwg.mxu0
    %2141 = vmatpush.bf16.msra.mxu0 %v2016
    %2142 = vmatpush.bf16.msra.mxu0 %v2012
    %2143 = vmatpush.bf16.msra.mxu0 %v2008
    %2144 = vmatpush.bf16.msra.mxu0 %v2004
    %2145 = vmatpush.bf16.msra.mxu0 %v2000
    %2146 = vmatpush.bf16.msra.mxu0 %v1996
    %2147 = vmatpush.bf16.msra.mxu0 %v1992
    %2148 = vmatpush.bf16.msra.mxu0 %v1988
    %2149 = vmatmul.bf16.gmra.mxu0 %v1717
    %v2150 = vpop.f32.mrf.mxu0
    %v2151 = vadd.f32 %v1788, %v2150
    %v2152 = vpop.f32.mrf.mxu0
    %2153 = vdwg.mxu0
    %2154 = vmatpush.bf16.msra.mxu0 %v2048
    %2155 = vmatpush.bf16.msra.mxu0 %v2044
    %2156 = vmatpush.bf16.msra.mxu0 %v2040
    %2157 = vmatpush.bf16.msra.mxu0 %v2036
    %2158 = vmatpush.bf16.msra.mxu0 %v2032
    %2159 = vmatpush.bf16.msra.mxu0 %v2028
    %2160 = vmatpush.bf16.msra.mxu0 %v2024
    %2161 = vmatpush.bf16.msra.mxu0 %v2020
    %2162 = vmatmul.bf16.gmra.mxu0 %v1718
    %v2163 = vpop.f32.mrf.mxu0
    %v2164 = vadd.f32 %v2151, %v2163
    %v2165 = vpop.f32.mrf.mxu0
    %2166 = vdwg.mxu0
    %2167 = vmatpush.bf16.msra.mxu0 %v2017
    %2168 = vmatpush.bf16.msra.mxu0 %v2013
    %2169 = vmatpush.bf16.msra.mxu0 %v2009
    %2170 = vmatpush.bf16.msra.mxu0 %v2005
    %2171 = vmatpush.bf16.msra.mxu0 %v2001
    %2172 = vmatpush.bf16.msra.mxu0 %v1997
    %2173 = vmatpush.bf16.msra.mxu0 %v1993
    %2174 = vmatpush.bf16.msra.mxu0 %v1989
    %2175 = vmatmul.bf16.gmra.mxu0 %v1717
    %v2176 = vpop.f32.mrf.mxu0
    %v2177 = vadd.f32 %v1789, %v2176
    %v2178 = vpop.f32.mrf.mxu0
    %2179 = vdwg.mxu0
    %2180 = vmatpush.bf16.msra.mxu0 %v2049
    %2181 = vmatpush.bf16.msra.mxu0 %v2045
    %2182 = vmatpush.bf16.msra.mxu0 %v2041
    %2183 = vmatpush.bf16.msra.mxu0 %v2037
    %2184 = vmatpush.bf16.msra.mxu0 %v2033
    %2185 = vmatpush.bf16.msra.mxu0 %v2029
    %2186 = vmatpush.bf16.msra.mxu0 %v2025
    %2187 = vmatpush.bf16.msra.mxu0 %v2021
    %2188 = vmatmul.bf16.gmra.mxu0 %v1718
    %v2189 = vpop.f32.mrf.mxu0
    %v2190 = vadd.f32 %v2177, %v2189
    %v2191 = vpop.f32.mrf.mxu0
    %2192 = vdwg.mxu0
    %2193 = vmatpush.bf16.msra.mxu0 %v2018
    %2194 = vmatpush.bf16.msra.mxu0 %v2014
    %2195 = vmatpush.bf16.msra.mxu0 %v2010
    %2196 = vmatpush.bf16.msra.mxu0 %v2006
    %2197 = vmatpush.bf16.msra.mxu0 %v2002
    %2198 = vmatpush.bf16.msra.mxu0 %v1998
    %2199 = vmatpush.bf16.msra.mxu0 %v1994
    %2200 = vmatpush.bf16.msra.mxu0 %v1990
    %2201 = vmatmul.bf16.gmra.mxu0 %v1717
    %v2202 = vpop.f32.mrf.mxu0
    %v2203 = vadd.f32 %v1790, %v2202
    %v2204 = vpop.f32.mrf.mxu0
    %2205 = vdwg.mxu0
    %2206 = vmatpush.bf16.msra.mxu0 %v2050
    %2207 = vmatpush.bf16.msra.mxu0 %v2046
    %2208 = vmatpush.bf16.msra.mxu0 %v2042
    %2209 = vmatpush.bf16.msra.mxu0 %v2038
    %2210 = vmatpush.bf16.msra.mxu0 %v2034
    %2211 = vmatpush.bf16.msra.mxu0 %v2030
    %2212 = vmatpush.bf16.msra.mxu0 %v2026
    %2213 = vmatpush.bf16.msra.mxu0 %v2022
    %2214 = vmatmul.bf16.gmra.mxu0 %v1718
    %v2215 = vpop.f32.mrf.mxu0
    %v2216 = vadd.f32 %v2203, %v2215
    %v2217 = vpop.f32.mrf.mxu0
    %2218 = vdwg.mxu0
    %v2219 = vxor.u32 %v2138, 2147483648
    %v2220 = vmul.f32 %v2219, 1.442695
    %v2221 = vpow.pop %v2220
    %v2222 = vadd.f32 %v2221, 1.0
    %v2223 = vrcp.pop %v2222
    %v2224 = vmul.f32 %v2222, %v2223
    %v2225 = vsub.f32 1.0, %v2224
    %v2226 = vmul.f32 %v2223, %v2225
    %v2227 = vadd.f32 %v2223, %v2226
    %vm2228 = vweird.f32 %v2222
    %vm2229 = vweird.f32 %v2223
    %vm2230 = vmor %vm2228, %vm2229
    %v2231 = vsel %vm2230, %v2223, %v2227
    %v2232 = vand.u32 2147483647, %v2222
    %vm2233 = vcmp.eq.f32.partialorder %v2232, 8.507059e+37
    %v2234 = vand.u32 %v2222, 2147483648
    %v2235 = vor.u32 1.1754944e-38, %v2234
    %v2236 = vsel %vm2233, %v2235, %v2231
    %v2237 = vmul.f32 1.0, %v2236
    %v2238 = vxor.u32 %v2164, 2147483648
    %v2239 = vmul.f32 %v2238, 1.442695
    %v2240 = vpow.pop %v2239
    %v2241 = vadd.f32 %v2240, 1.0
    %v2242 = vrcp.pop %v2241
    %v2243 = vmul.f32 %v2241, %v2242
    %v2244 = vsub.f32 1.0, %v2243
    %v2245 = vmul.f32 %v2242, %v2244
    %v2246 = vadd.f32 %v2242, %v2245
    %vm2247 = vweird.f32 %v2241
    %vm2248 = vweird.f32 %v2242
    %vm2249 = vmor %vm2247, %vm2248
    %v2250 = vsel %vm2249, %v2242, %v2246
    %v2251 = vand.u32 2147483647, %v2241
    %vm2252 = vcmp.eq.f32.partialorder %v2251, 8.507059e+37
    %v2253 = vand.u32 %v2241, 2147483648
    %v2254 = vor.u32 1.1754944e-38, %v2253
    %v2255 = vsel %vm2252, %v2254, %v2250
    %v2256 = vmul.f32 1.0, %v2255
    %v2257 = vmul.f32 %v2237, %v2216
    %v2258 = vadd.f32 %v2190, %v2257
    %v2259 = vtanh.pop %v2258
    %v2260 = vsub.f32 1.0, %v2256
    %v2261 = vmul.f32 %v2260, %v2259
    %v2262 = vmul.f32 %v2256, %v1716
    %v2263 = vadd.f32 %v2261, %v2262
    %v2268 = vrot.slane %v1167, 6
    %v2269 = vrot.slane %v1715, 4
    %v2270 = vrot.slane %v2263, 2
    %vm2271 = vcmask 1041408
    %v2272 = vsel %vm2271, %v619, %v2268
    %vm2273 = vcmask 1045508
    %v2274 = vsel %vm2273, %v2269, %v2270
    %vm2275 = vcmask 1043456
    %v2276 = vsel %vm2275, %v2272, %v2274
    %2278 = vst [vmem:[%s7] sm:$0xff] %v2276
    %v2279 = vpack.c.bf16 %v2263, %v2263
    %v2280 = vld [vmem:[#allocation7] sm:$0xf]
    %v2281 = vld [vmem:[#allocation7 + $0x4] sm:$0xf]
    %v2282 = vld [vmem:[#allocation7 + $0x8] sm:$0xf]
    %v2283 = vld [vmem:[#allocation7 + $0xc] sm:$0xf]
    %v2284 = vld [vmem:[#allocation7 + $0x10] sm:$0xf]
    %v2285 = vld [vmem:[#allocation7 + $0x14] sm:$0xf]
    %v2286 = vld [vmem:[#allocation7 + $0x18] sm:$0xf]
    %v2287 = vld [vmem:[#allocation7 + $0x1c] sm:$0xf]
    %v2288 = vld [vmem:[#allocation7 + $0x20] sm:$0xf]
    %v2289 = vld [vmem:[#allocation7 + $0x24] sm:$0xf]
    %v2290 = vld [vmem:[#allocation7 + $0x28] sm:$0xf]
    %v2291 = vld [vmem:[#allocation7 + $0x2c] sm:$0xf]
    %v2292 = vld [vmem:[#allocation7 + $0x30] sm:$0xf]
    %v2293 = vld [vmem:[#allocation7 + $0x34] sm:$0xf]
    %v2294 = vld [vmem:[#allocation7 + $0x38] sm:$0xf]
    %v2295 = vld [vmem:[#allocation7 + $0x3c] sm:$0xf]
    %v2296 = vld [vmem:[%s5] sm:$0x1]
    %v2298 = vperm.slane %v2296, 0
    %v2316 = vunpack.c.l.b16 %v2280
    %v2317 = vunpack.c.l.b16 %v2281
    %v2318 = vunpack.c.l.b16 %v2282
    %v2319 = vunpack.c.l.b16 %v2283
    %v2320 = vunpack.c.l.b16 %v2284
    %v2321 = vunpack.c.l.b16 %v2285
    %v2322 = vunpack.c.l.b16 %v2286
    %v2323 = vunpack.c.l.b16 %v2287
    %v2324 = vunpack.c.l.b16 %v2288
    %v2325 = vunpack.c.l.b16 %v2289
    %v2326 = vunpack.c.l.b16 %v2290
    %v2327 = vunpack.c.l.b16 %v2291
    %v2328 = vunpack.c.l.b16 %v2292
    %v2329 = vunpack.c.l.b16 %v2293
    %v2330 = vunpack.c.l.b16 %v2294
    %v2331 = vunpack.c.l.b16 %v2295
    %v2332 = vpack.c.b16 %v2317, %v2316
    %v2333 = vpack.c.b16 %v2319, %v2318
    %v2334 = vpack.c.b16 %v2321, %v2320
    %v2335 = vpack.c.b16 %v2323, %v2322
    %v2336 = vpack.c.b16 %v2325, %v2324
    %v2337 = vpack.c.b16 %v2327, %v2326
    %v2338 = vpack.c.b16 %v2329, %v2328
    %v2339 = vpack.c.b16 %v2331, %v2330
    %2348 = vmatpush.bf16.msra.mxu0 %v2339
    %2349 = vmatpush.bf16.msra.mxu0 %v2338
    %2350 = vmatpush.bf16.msra.mxu0 %v2337
    %2351 = vmatpush.bf16.msra.mxu0 %v2336
    %2352 = vmatpush.bf16.msra.mxu0 %v2335
    %2353 = vmatpush.bf16.msra.mxu0 %v2334
    %2354 = vmatpush.bf16.msra.mxu0 %v2333
    %2355 = vmatpush.bf16.msra.mxu0 %v2332
    %2356 = vmatmul.bf16.gmra.mxu0 %v2279
    %v2357 = vpop.f32.mrf.mxu0
    %v2358 = vadd.f32 %v2298, %v2357
    %v2359 = vpop.f32.mrf.mxu0
    %2360 = vdwg.mxu0
    %2361 = vst [vmem:[#allocation8] sm:$0x3] %v2358
    // Predicated region
    $region38: #{recurrent_policy_forward.1} parent=1 // pred_check
      _
    $region39: #{recurrent_policy_forward.1} parent=1 // pred_check_branch
      %2363 = sbr.rel (0) target = $region41
    $region40: #{recurrent_policy_forward.1} parent=1 // pred_region
      %2365 = vsyncadd [#allocation4], 0
      %s2367 = sshll.u32 [#allocation8], 4
      %s2368 = int_to_ptr.vmem [resolvable:$true] %s2367
      %s2369 = sshll.u32 %s6, 4
      %s2370 = int_to_ptr.hbm [resolvable:$true] %s2369
      %2372 = dma.vmem_to_hbm [thread:$0]  %s2368, 32, %s2370, [#allocation4]
    $region41: #{recurrent_policy_forward.1} parent=1 // pred_fallthru
      _
    // Predicated region
    $region42: #{recurrent_policy_forward.1} parent=1 // pred_check
      _
    $region43: #{recurrent_policy_forward.1} parent=1 // pred_check_branch
      %2374 = sbr.rel (0) target = $region45
    $region44: #{recurrent_policy_forward.1} parent=1 // pred_region
      _
    $region45: #{recurrent_policy_forward.1} parent=1 // pred_fallthru
      _
    // Predicated region
    $region46: #{recurrent_policy_forward.1} parent=1 // pred_check
      _
    $region47: #{recurrent_policy_forward.1} parent=1 // pred_check_branch
      %2376 = sbr.rel (0) target = $region49
    $region48: #{recurrent_policy_forward.1} parent=1 // pred_region
      %2378 = dma.done [#allocation4], 32
    $region49: #{recurrent_policy_forward.1} parent=1 // pred_fallthru
      _
    // Predicated region
    $region50: #{recurrent_policy_forward.1} parent=1 // pred_check
      _
    $region51: #{recurrent_policy_forward.1} parent=1 // pred_check_branch
      %2380 = sbr.rel (0) target = $region53
    $region52: #{recurrent_policy_forward.1} parent=1 // pred_region
      _
    $region53: #{recurrent_policy_forward.1} parent=1 // pred_fallthru
      _
    %2381 = vsyncpa [#allocation3], 1
    %2382 = vsyncpa [#allocation6], 1
    %2383 = vsyncpa [#allocation4], 1

</llo_original>
